<compile_context>
chip_gen: v5e
topology: v5e:2x2
jax: 0.10.0
libtpu: 0.0.40
codegen_flags: <defaults>
</compile_context>

<pallas_src>
import functools

import jax
import jax.numpy as jnp
from jax.experimental import pallas as pl
from jax.experimental.pallas import tpu as pltpu

EPS = 1e-5
_MXU_DTYPE = jnp.bfloat16      # MXU-operand / staging dtype (accumulation f32)
_CHUNK = 512                   # max lanes processed per in-kernel chunk
# Channel blocks padded to the sublane packing of the MXU dtype (16 for bf16,
# 8 for f32) so the 9-tap sublane concat is tile-aligned.
_C_ALIGN = 8 * (4 // jnp.dtype(_MXU_DTYPE).itemsize)


def _round_up(v, m):
    return (v + m - 1) // m * m


# -----------------------------------------------------------------------------
# kernel
# -----------------------------------------------------------------------------
def _double_conv_kernel(x_ref, m_ref, w1_ref, g1_ref, b1_ref,
                        w2_ref, g2_ref, b2_ref, o_ref, hbuf_ref, acc1_ref,
                        *, W, n_pix, halo, chunk, mask_center):
    """Fused DoubleConv, channel-major (C on sublanes, N*H*W pixels on lanes).

    x_ref   : (Cin_p,  halo + P_pad + halo) bf16   zero-extended input
    m_ref   : (9, P_pad)                    bf16   0/1 tap-validity masks
              (image boundary AND pixel-pad validity), precomputed once by the
              wrapper and reused by both convs
    w1_ref  : (Cmid_p, 9*Cin_p) bf16    w2_ref : (Cout_p, 9*Cmid_p) bf16
    g*/b*   : (C_p, 1) f32    BN affine params
    o_ref   : (Cout_p, P_pad) f32      lane-dense output
    hbuf_ref: (Cmid_p, halo + P_pad + halo) bf16   conv2 halo buffer
    acc1_ref: (Cmid_p, P_pad) f32      raw conv1 staging (multi-chunk only)
    """
    P_pad = o_ref.shape[1]
    n_chunks = P_pad // chunk
    cmid_p = hbuf_ref.shape[0]
    cout_p = o_ref.shape[0]
    inv_n = 1.0 / n_pix                      # true pixel count (excl. padding)

    def im2col(src_ref, lo):
        # (9*C, chunk) bf16 slab; boundary/pad masking fused into the narrow
        # dtype as one broadcast multiply per non-center tap.
        taps = []
        order = [(ky, kx) for ky in range(3) for kx in range(3)]
        for t, (ky, kx) in enumerate(order):
            s = (ky - 1) * W + (kx - 1)
            tap = src_ref[:, halo + lo + s:halo + lo + s + chunk]
            if t != 4 or mask_center:        # center needs a mask only when
                tap = tap * m_ref[t:t + 1, lo:lo + chunk]   # the pixel axis is padded
            taps.append(tap)
        return jnp.concatenate(taps, axis=0)  # tile-aligned sublane concat

    def bn_scale_bias(s, q, g_ref, b_ref):
        # Training-mode batch stats (biased variance), folded into one FMA.
        mean = s * inv_n
        var = jnp.maximum(q * inv_n - mean * mean, 0.0)   # clamp E[x^2]-E[x]^2
        scale = g_ref[...] * jax.lax.rsqrt(var + EPS)
        return scale, b_ref[...] - mean * scale

    def conv_bn_relu(src_ref, w_ref, g_ref, b_ref, stage_ref, c_rows,
                     dst_ref, dst_off):
        # stats pass: raw conv acc (f32) -> stage_ref (or registers, 1 chunk)
        s = jnp.zeros((c_rows, 1), jnp.float32)
        q = jnp.zeros((c_rows, 1), jnp.float32)
        acc_reg = None
        for ci in range(n_chunks):
            lo = ci * chunk
            acc = jnp.dot(w_ref[...], im2col(src_ref, lo),
                          preferred_element_type=jnp.float32)
            s = s + jnp.sum(acc, axis=1, keepdims=True)
            q = q + jnp.sum(acc * acc, axis=1, keepdims=True)
            if n_chunks == 1:
                acc_reg = acc
            else:
                stage_ref[:, lo:lo + chunk] = acc
        scale, bias = bn_scale_bias(s, q, g_ref, b_ref)
        # normalize pass: y = max(acc * scale + bias, 0) -> dst_ref
        for ci in range(n_chunks):
            lo = ci * chunk
            raw = acc_reg if n_chunks == 1 else stage_ref[:, lo:lo + chunk]
            y = jnp.maximum(raw * scale + bias, 0.0)
            dst_ref[:, dst_off + lo:dst_off + lo + chunk] = y.astype(dst_ref.dtype)

    # hbuf: zero only the two halo bands; the body is fully overwritten below.
    hbuf_ref[:, :halo] = jnp.zeros((cmid_p, halo), hbuf_ref.dtype)
    hbuf_ref[:, halo + P_pad:] = jnp.zeros((cmid_p, halo), hbuf_ref.dtype)

    # conv1 + BN1 + ReLU -> bf16 halo buffer
    conv_bn_relu(x_ref, w1_ref, g1_ref, b1_ref, acc1_ref, cmid_p,
                 hbuf_ref, halo)
    # conv2 + BN2 + ReLU -> f32 output (raw acc staged in o_ref itself)
    conv_bn_relu(hbuf_ref, w2_ref, g2_ref, b2_ref, o_ref, cout_p,
                 o_ref, 0)


# -----------------------------------------------------------------------------
# wrapper (pure layout plumbing: NCHW <-> channel-major flattened pixels)
# -----------------------------------------------------------------------------
def _pack_weight(w_oihw, cin_p, cout_p):
    co, ci, kh, kw = w_oihw.shape
    w = jnp.transpose(w_oihw, (0, 2, 3, 1))                 # (co, kh, kw, ci)
    w = jnp.pad(w, ((0, cout_p - co), (0, 0), (0, 0), (0, cin_p - ci)))
    return w.reshape(cout_p, kh * kw * cin_p).astype(_MXU_DTYPE)


def _pack_bn(v, c_p):
    return jnp.pad(v.astype(jnp.float32), (0, c_p - v.shape[0])).reshape(c_p, 1)


def _tap_masks(P, P_pad, H, W):
    """(9, P_pad) 0/1 multipliers: 3x3 zero-pad boundary validity AND'ed with
    pixel-padding validity.  Computed once per call, reused by both convs."""
    pix = jnp.arange(P_pad, dtype=jnp.int32)
    h_idx = (pix // W) % H
    w_idx = pix % W
    inb = pix < P
    rows = []
    for ky in range(3):
        for kx in range(3):
            dy, dx = ky - 1, kx - 1
            v = (inb & (h_idx + dy >= 0) & (h_idx + dy < H)
                 & (w_idx + dx >= 0) & (w_idx + dx < W))
            rows.append(v)
    return jnp.stack(rows).astype(_MXU_DTYPE)


def double_conv(x_nchw, w1, g1, b1, w2, g2, b2):
    """x: (N, Cin, H, W) f32; w*: PyTorch-layout (Cout, Cin, 3, 3); g/b: (C,).

    Conv MXU operands are bf16 (f32 accumulation); BatchNorm uses
    training-mode batch statistics (biased variance, eps=1e-5) with affine
    gamma/beta, matching a freshly constructed torch DoubleConv in train().
    Returns (N, Cout, H, W) f32.
    """
    N, Cin, H, W = x_nchw.shape
    Cmid, Cout = w1.shape[0], w2.shape[0]
    P = N * H * W

    cin_p = _round_up(Cin, _C_ALIGN)
    cmid_p = _round_up(Cmid, _C_ALIGN)
    cout_p = _round_up(Cout, _C_ALIGN)
    halo = _round_up(W + 1, 128)            # covers every +-(W+1) tap shift
    chunk = min(_CHUNK, _round_up(P, 128))
    P_pad = _round_up(P, chunk)

    # Channel-major, lane-dense, bf16 input with a lane-aligned zero halo.
    # TODO(synk): gridding over N with per-image BlockSpecs (+ two-pass BN)
    # would remove this transpose pair at production sizes.
    x_t = jnp.transpose(x_nchw, (1, 0, 2, 3)).reshape(Cin, P).astype(_MXU_DTYPE)
    x_t = jnp.pad(x_t, ((0, cin_p - Cin), (halo, halo + (P_pad - P))))

    masks = _tap_masks(P, P_pad, H, W)
    w1_r = _pack_weight(w1, cin_p, cmid_p)
    w2_r = _pack_weight(w2, cmid_p, cout_p)

    # Scoped-VMEM budget from the actual buffers (+ headroom for temporaries).
    est = (x_t.size * 2 + masks.size * 2 + w1_r.size * 2 + w2_r.size * 2
           + (cmid_p + cout_p) * 2 * 4
           + cmid_p * (P_pad + 2 * halo) * 2     # hbuf scratch (bf16)
           + cmid_p * P_pad * 4                  # raw conv1 acc scratch (f32)
           + cout_p * P_pad * 4)                 # output (f32)
    vmem_limit = int(min(96 * 2 ** 20, max(32 * 2 ** 20, 4 * est)))

    out_t = pl.pallas_call(
        functools.partial(_double_conv_kernel, W=W, n_pix=P, halo=halo,
                          chunk=chunk, mask_center=(P_pad != P)),
        out_shape=jax.ShapeDtypeStruct((cout_p, P_pad), jnp.float32),
        in_specs=[pl.BlockSpec(memory_space=pltpu.MemorySpace.VMEM)] * 8,
        out_specs=pl.BlockSpec(memory_space=pltpu.MemorySpace.VMEM),
        scratch_shapes=[
            pltpu.VMEM((cmid_p, P_pad + 2 * halo), _MXU_DTYPE),   # hbuf
            pltpu.VMEM((cmid_p, P_pad), jnp.float32),             # raw acc1
        ],
        compiler_params=pltpu.CompilerParams(vmem_limit_bytes=vmem_limit),
    )(x_t, masks, w1_r, _pack_bn(g1, cmid_p), _pack_bn(b1, cmid_p),
      w2_r, _pack_bn(g2, cout_p), _pack_bn(b2, cout_p))

    # (Cout_p, P_pad) -> (N, Cout, H, W): wrapper-side layout plumbing only.
    out = out_t[:Cout, :P].reshape(Cout, N, H, W)
    return jnp.transpose(out, (1, 0, 2, 3))


# -----------------------------------------------------------------------------
# pure-JAX reference.  Conv operand dtype mirrors the kernel (bf16 MXU
# operands, f32 accumulation / BN) so the comparison isolates kernel logic;
# the remaining difference vs. a full-f32 torch DoubleConv is the documented
# bf16-operand rounding.
# -----------------------------------------------------------------------------
def double_conv_reference(x, w1, g1, b1, w2, g2, b2):
    def conv(inp, w):
        return jax.lax.conv_general_dilated(
            inp.astype(_MXU_DTYPE), w.astype(_MXU_DTYPE),
            window_strides=(1, 1), padding=((1, 1), (1, 1)),
            dimension_numbers=("NCHW", "OIHW", "NCHW"),
            preferred_element_type=jnp.float32)

    def bn_relu(z, g, b):
        mean = jnp.mean(z, axis=(0, 2, 3), keepdims=True)
        var = jnp.mean((z - mean) ** 2, axis=(0, 2, 3), keepdims=True)
        y = (z - mean) * jax.lax.rsqrt(var + EPS)
        y = y * g.reshape(1, -1, 1, 1) + b.reshape(1, -1, 1, 1)
        return jnp.maximum(y, 0.0)

    h = bn_relu(conv(x, w1), g1, b1)
    return bn_relu(conv(h, w2), g2, b2)


if __name__ == "__main__":
    # DoubleConv(in_channels=4, out_channels=8) at a small spatial size.
    N, Cin, Cmid, Cout, H, W = 2, 4, 8, 8, 16, 16

    key = jax.random.PRNGKey(0)
    k_x, k_w1, k_w2, k_b1, k_b2 = jax.random.split(key, 5)

    x = jax.random.normal(k_x, (N, Cin, H, W), dtype=jnp.float32)
    # PyTorch layouts: Conv2d weight (Cout, Cin, 3, 3); BN affine params (C,).
    w1 = 0.1 * jax.random.normal(k_w1, (Cmid, Cin, 3, 3), dtype=jnp.float32)
    w2 = 0.1 * jax.random.normal(k_w2, (Cout, Cmid, 3, 3), dtype=jnp.float32)
    g1 = jnp.ones((Cmid,), jnp.float32)
    b1 = 0.05 * jax.random.normal(k_b1, (Cmid,), dtype=jnp.float32)
    g2 = jnp.ones((Cout,), jnp.float32)
    b2 = 0.05 * jax.random.normal(k_b2, (Cout,), dtype=jnp.float32)

    out = jax.block_until_ready(double_conv(x, w1, g1, b1, w2, g2, b2))
    ref = jax.block_until_ready(double_conv_reference(x, w1, g1, b1, w2, g2, b2))

    assert out.shape == (N, Cout, H, W), out.shape
    max_err = float(jnp.max(jnp.abs(out - ref)))
    # Tolerance covers independent bf16 rounding of the conv2 input between
    # kernel and reference (observed error is ~1e-3 at these magnitudes).
    assert jnp.allclose(out, ref, rtol=1e-2, atol=1e-2), max_err

    print("KERNEL_OK")
</pallas_src>

<mosaic_0001>
module attributes {stable_mosaic.version = 11 : i64} {
  func.func @_double_conv_kernel(%arg0: memref<16x768xbf16, #tpu.memory_space<vmem>>, %arg1: memref<9x512xbf16, #tpu.memory_space<vmem>>, %arg2: memref<16x144xbf16, #tpu.memory_space<vmem>>, %arg3: memref<16x1xf32, #tpu.memory_space<vmem>>, %arg4: memref<16x1xf32, #tpu.memory_space<vmem>>, %arg5: memref<16x144xbf16, #tpu.memory_space<vmem>>, %arg6: memref<16x1xf32, #tpu.memory_space<vmem>>, %arg7: memref<16x1xf32, #tpu.memory_space<vmem>>, %arg8: memref<16x512xf32, #tpu.memory_space<vmem>>, %arg9: memref<16x768xbf16, #tpu.memory_space<vmem>>, %arg10: memref<16x512xf32, #tpu.memory_space<vmem>>) attributes {dimension_semantics = [], scalar_prefetch = 0 : i64, scratch_operands = 2 : i64, tpu.core_type = #tpu.core_type<tc>} {
    %cst = arith.constant 0.000000e+00 : bf16
    %0 = vector.broadcast %cst : bf16 to vector<16x128xbf16>
    %c0 = arith.constant 0 : index
    %c0_0 = arith.constant 0 : index
    %1 = vector.load %arg9[%c0, %c0_0] : memref<16x768xbf16, #tpu.memory_space<vmem>>, vector<16x128xbf16>
    tpu.vector_store %arg9[%c0, %c0_0], %0 {strides = array<i32>} : memref<16x768xbf16, #tpu.memory_space<vmem>>, vector<16x128xbf16>,
    %cst_1 = arith.constant 0.000000e+00 : bf16
    %2 = vector.broadcast %cst_1 : bf16 to vector<16x128xbf16>
    %c0_2 = arith.constant 0 : index
    %c640 = arith.constant 640 : index
    %3 = vector.load %arg9[%c0_2, %c640] : memref<16x768xbf16, #tpu.memory_space<vmem>>, vector<16x128xbf16>
    tpu.vector_store %arg9[%c0_2, %c640], %2 {strides = array<i32>} : memref<16x768xbf16, #tpu.memory_space<vmem>>, vector<16x128xbf16>,
    %cst_3 = arith.constant 0.000000e+00 : f32
    %4 = vector.broadcast %cst_3 : f32 to vector<16x1xf32>
    %cst_4 = arith.constant 0.000000e+00 : f32
    %5 = vector.broadcast %cst_4 : f32 to vector<16x1xf32>
    %c0_5 = arith.constant 0 : index
    %c0_6 = arith.constant 0 : index
    %6 = vector.load %arg2[%c0_5, %c0_6] : memref<16x144xbf16, #tpu.memory_space<vmem>>, vector<16x144xbf16>
    %c0_7 = arith.constant 0 : index
    %c111 = arith.constant 111 : index
    %7 = vector.load %arg0[%c0_7, %c111] : memref<16x768xbf16, #tpu.memory_space<vmem>>, vector<16x512xbf16>
    %c0_8 = arith.constant 0 : index
    %c0_9 = arith.constant 0 : index
    %8 = vector.load %arg1[%c0_8, %c0_9] : memref<9x512xbf16, #tpu.memory_space<vmem>>, vector<1x512xbf16>
    %9 = vector.broadcast %8 : vector<1x512xbf16> to vector<16x512xbf16>
    %10 = arith.mulf %7, %9 : vector<16x512xbf16>
    %c0_10 = arith.constant 0 : index
    %c112 = arith.constant 112 : index
    %11 = vector.load %arg0[%c0_10, %c112] : memref<16x768xbf16, #tpu.memory_space<vmem>>, vector<16x512xbf16>
    %c1 = arith.constant 1 : index
    %c0_11 = arith.constant 0 : index
    %12 = vector.load %arg1[%c1, %c0_11] : memref<9x512xbf16, #tpu.memory_space<vmem>>, vector<1x512xbf16>
    %13 = vector.broadcast %12 : vector<1x512xbf16> to vector<16x512xbf16>
    %14 = arith.mulf %11, %13 : vector<16x512xbf16>
    %c0_12 = arith.constant 0 : index
    %c113 = arith.constant 113 : index
    %15 = vector.load %arg0[%c0_12, %c113] : memref<16x768xbf16, #tpu.memory_space<vmem>>, vector<16x512xbf16>
    %c2 = arith.constant 2 : index
    %c0_13 = arith.constant 0 : index
    %16 = vector.load %arg1[%c2, %c0_13] : memref<9x512xbf16, #tpu.memory_space<vmem>>, vector<1x512xbf16>
    %17 = vector.broadcast %16 : vector<1x512xbf16> to vector<16x512xbf16>
    %18 = arith.mulf %15, %17 : vector<16x512xbf16>
    %c0_14 = arith.constant 0 : index
    %c127 = arith.constant 127 : index
    %19 = vector.load %arg0[%c0_14, %c127] : memref<16x768xbf16, #tpu.memory_space<vmem>>, vector<16x512xbf16>
    %c3 = arith.constant 3 : index
    %c0_15 = arith.constant 0 : index
    %20 = vector.load %arg1[%c3, %c0_15] : memref<9x512xbf16, #tpu.memory_space<vmem>>, vector<1x512xbf16>
    %21 = vector.broadcast %20 : vector<1x512xbf16> to vector<16x512xbf16>
    %22 = arith.mulf %19, %21 : vector<16x512xbf16>
    %c0_16 = arith.constant 0 : index
    %c128 = arith.constant 128 : index
    %23 = vector.load %arg0[%c0_16, %c128] : memref<16x768xbf16, #tpu.memory_space<vmem>>, vector<16x512xbf16>
    %c0_17 = arith.constant 0 : index
    %c129 = arith.constant 129 : index
    %24 = vector.load %arg0[%c0_17, %c129] : memref<16x768xbf16, #tpu.memory_space<vmem>>, vector<16x512xbf16>
    %c5 = arith.constant 5 : index
    %c0_18 = arith.constant 0 : index
    %25 = vector.load %arg1[%c5, %c0_18] : memref<9x512xbf16, #tpu.memory_space<vmem>>, vector<1x512xbf16>
    %26 = vector.broadcast %25 : vector<1x512xbf16> to vector<16x512xbf16>
    %27 = arith.mulf %24, %26 : vector<16x512xbf16>
    %c0_19 = arith.constant 0 : index
    %c143 = arith.constant 143 : index
    %28 = vector.load %arg0[%c0_19, %c143] : memref<16x768xbf16, #tpu.memory_space<vmem>>, vector<16x512xbf16>
    %c6 = arith.constant 6 : index
    %c0_20 = arith.constant 0 : index
    %29 = vector.load %arg1[%c6, %c0_20] : memref<9x512xbf16, #tpu.memory_space<vmem>>, vector<1x512xbf16>
    %30 = vector.broadcast %29 : vector<1x512xbf16> to vector<16x512xbf16>
    %31 = arith.mulf %28, %30 : vector<16x512xbf16>
    %c0_21 = arith.constant 0 : index
    %c144 = arith.constant 144 : index
    %32 = vector.load %arg0[%c0_21, %c144] : memref<16x768xbf16, #tpu.memory_space<vmem>>, vector<16x512xbf16>
    %c7 = arith.constant 7 : index
    %c0_22 = arith.constant 0 : index
    %33 = vector.load %arg1[%c7, %c0_22] : memref<9x512xbf16, #tpu.memory_space<vmem>>, vector<1x512xbf16>
    %34 = vector.broadcast %33 : vector<1x512xbf16> to vector<16x512xbf16>
    %35 = arith.mulf %32, %34 : vector<16x512xbf16>
    %c0_23 = arith.constant 0 : index
    %c145 = arith.constant 145 : index
    %36 = vector.load %arg0[%c0_23, %c145] : memref<16x768xbf16, #tpu.memory_space<vmem>>, vector<16x512xbf16>
    %c8 = arith.constant 8 : index
    %c0_24 = arith.constant 0 : index
    %37 = vector.load %arg1[%c8, %c0_24] : memref<9x512xbf16, #tpu.memory_space<vmem>>, vector<1x512xbf16>
    %38 = vector.broadcast %37 : vector<1x512xbf16> to vector<16x512xbf16>
    %39 = arith.mulf %36, %38 : vector<16x512xbf16>
    %40 = tpu.concatenate %10, %14, %18, %22, %23, %27, %31, %35, %39 in 0 : vector<16x512xbf16>, vector<16x512xbf16>, vector<16x512xbf16>, vector<16x512xbf16>, vector<16x512xbf16>, vector<16x512xbf16>, vector<16x512xbf16>, vector<16x512xbf16>, vector<16x512xbf16> -> vector<144x512xbf16>
    %cst_25 = arith.constant dense<0.000000e+00> : vector<16x512xf32>
    %41 = tpu.matmul %6, %40, %cst_25 {dimension_numbers = #tpu.dot_dimension_numbers<[1], [0], [0], [1], [0, 0, 1, 1], [], []>} : vector<16x144xbf16>, vector<144x512xbf16>, vector<16x512xf32> -> vector<16x512xf32>
    %cst_26 = arith.constant dense<0.000000e+00> : vector<16xf32>
    %42 = vector.multi_reduction <add>, %41, %cst_26 [1] : vector<16x512xf32> to vector<16xf32>
    %43 = vector.shape_cast %42 : vector<16xf32> to vector<16x1xf32>
    %44 = arith.addf %4, %43 : vector<16x1xf32>
    %45 = arith.mulf %41, %41 : vector<16x512xf32>
    %cst_27 = arith.constant dense<0.000000e+00> : vector<16xf32>
    %46 = vector.multi_reduction <add>, %45, %cst_27 [1] : vector<16x512xf32> to vector<16xf32>
    %47 = vector.shape_cast %46 : vector<16xf32> to vector<16x1xf32>
    %48 = arith.addf %5, %47 : vector<16x1xf32>
    %cst_28 = arith.constant 0.001953125 : f32
    %49 = vector.broadcast %cst_28 : f32 to vector<16x1xf32>
    %50 = arith.mulf %44, %49 : vector<16x1xf32>
    %cst_29 = arith.constant 0.001953125 : f32
    %51 = vector.broadcast %cst_29 : f32 to vector<16x1xf32>
    %52 = arith.mulf %48, %51 : vector<16x1xf32>
    %53 = arith.mulf %50, %50 : vector<16x1xf32>
    %54 = arith.subf %52, %53 : vector<16x1xf32>
    %cst_30 = arith.constant 0.000000e+00 : f32
    %55 = vector.broadcast %cst_30 : f32 to vector<16x1xf32>
    %56 = arith.maximumf %54, %55 : vector<16x1xf32>
    %c0_31 = arith.constant 0 : index
    %c0_32 = arith.constant 0 : index
    %57 = vector.load %arg3[%c0_31, %c0_32] : memref<16x1xf32, #tpu.memory_space<vmem>>, vector<16x1xf32>
    %cst_33 = arith.constant 9.99999974E-6 : f32
    %58 = vector.broadcast %cst_33 : f32 to vector<16x1xf32>
    %59 = arith.addf %56, %58 : vector<16x1xf32>
    %60 = math.rsqrt %59 : vector<16x1xf32>
    %61 = arith.mulf %57, %60 : vector<16x1xf32>
    %c0_34 = arith.constant 0 : index
    %c0_35 = arith.constant 0 : index
    %62 = vector.load %arg4[%c0_34, %c0_35] : memref<16x1xf32, #tpu.memory_space<vmem>>, vector<16x1xf32>
    %63 = arith.mulf %50, %61 : vector<16x1xf32>
    %64 = arith.subf %62, %63 : vector<16x1xf32>
    %65 = vector.broadcast %61 : vector<16x1xf32> to vector<16x512xf32>
    %66 = arith.mulf %41, %65 : vector<16x512xf32>
    %67 = vector.broadcast %64 : vector<16x1xf32> to vector<16x512xf32>
    %68 = arith.addf %66, %67 : vector<16x512xf32>
    %cst_36 = arith.constant 0.000000e+00 : f32
    %69 = vector.broadcast %cst_36 : f32 to vector<16x512xf32>
    %70 = arith.maximumf %68, %69 : vector<16x512xf32>
    %71 = arith.truncf %70 : vector<16x512xf32> to vector<16x512xbf16>
    %c0_37 = arith.constant 0 : index
    %c128_38 = arith.constant 128 : index
    %72 = vector.load %arg9[%c0_37, %c128_38] : memref<16x768xbf16, #tpu.memory_space<vmem>>, vector<16x512xbf16>
    tpu.vector_store %arg9[%c0_37, %c128_38], %71 {strides = array<i32>} : memref<16x768xbf16, #tpu.memory_space<vmem>>, vector<16x512xbf16>,
    %cst_39 = arith.constant 0.000000e+00 : f32
    %73 = vector.broadcast %cst_39 : f32 to vector<16x1xf32>
    %cst_40 = arith.constant 0.000000e+00 : f32
    %74 = vector.broadcast %cst_40 : f32 to vector<16x1xf32>
    %c0_41 = arith.constant 0 : index
    %c0_42 = arith.constant 0 : index
    %75 = vector.load %arg5[%c0_41, %c0_42] : memref<16x144xbf16, #tpu.memory_space<vmem>>, vector<16x144xbf16>
    %c0_43 = arith.constant 0 : index
    %c111_44 = arith.constant 111 : index
    %76 = vector.load %arg9[%c0_43, %c111_44] : memref<16x768xbf16, #tpu.memory_space<vmem>>, vector<16x512xbf16>
    %c0_45 = arith.constant 0 : index
    %c0_46 = arith.constant 0 : index
    %77 = vector.load %arg1[%c0_45, %c0_46] : memref<9x512xbf16, #tpu.memory_space<vmem>>, vector<1x512xbf16>
    %78 = vector.broadcast %77 : vector<1x512xbf16> to vector<16x512xbf16>
    %79 = arith.mulf %76, %78 : vector<16x512xbf16>
    %c0_47 = arith.constant 0 : index
    %c112_48 = arith.constant 112 : index
    %80 = vector.load %arg9[%c0_47, %c112_48] : memref<16x768xbf16, #tpu.memory_space<vmem>>, vector<16x512xbf16>
    %c1_49 = arith.constant 1 : index
    %c0_50 = arith.constant 0 : index
    %81 = vector.load %arg1[%c1_49, %c0_50] : memref<9x512xbf16, #tpu.memory_space<vmem>>, vector<1x512xbf16>
    %82 = vector.broadcast %81 : vector<1x512xbf16> to vector<16x512xbf16>
    %83 = arith.mulf %80, %82 : vector<16x512xbf16>
    %c0_51 = arith.constant 0 : index
    %c113_52 = arith.constant 113 : index
    %84 = vector.load %arg9[%c0_51, %c113_52] : memref<16x768xbf16, #tpu.memory_space<vmem>>, vector<16x512xbf16>
    %c2_53 = arith.constant 2 : index
    %c0_54 = arith.constant 0 : index
    %85 = vector.load %arg1[%c2_53, %c0_54] : memref<9x512xbf16, #tpu.memory_space<vmem>>, vector<1x512xbf16>
    %86 = vector.broadcast %85 : vector<1x512xbf16> to vector<16x512xbf16>
    %87 = arith.mulf %84, %86 : vector<16x512xbf16>
    %c0_55 = arith.constant 0 : index
    %c127_56 = arith.constant 127 : index
    %88 = vector.load %arg9[%c0_55, %c127_56] : memref<16x768xbf16, #tpu.memory_space<vmem>>, vector<16x512xbf16>
    %c3_57 = arith.constant 3 : index
    %c0_58 = arith.constant 0 : index
    %89 = vector.load %arg1[%c3_57, %c0_58] : memref<9x512xbf16, #tpu.memory_space<vmem>>, vector<1x512xbf16>
    %90 = vector.broadcast %89 : vector<1x512xbf16> to vector<16x512xbf16>
    %91 = arith.mulf %88, %90 : vector<16x512xbf16>
    %c0_59 = arith.constant 0 : index
    %c128_60 = arith.constant 128 : index
    %92 = vector.load %arg9[%c0_59, %c128_60] : memref<16x768xbf16, #tpu.memory_space<vmem>>, vector<16x512xbf16>
    %c0_61 = arith.constant 0 : index
    %c129_62 = arith.constant 129 : index
    %93 = vector.load %arg9[%c0_61, %c129_62] : memref<16x768xbf16, #tpu.memory_space<vmem>>, vector<16x512xbf16>
    %c5_63 = arith.constant 5 : index
    %c0_64 = arith.constant 0 : index
    %94 = vector.load %arg1[%c5_63, %c0_64] : memref<9x512xbf16, #tpu.memory_space<vmem>>, vector<1x512xbf16>
    %95 = vector.broadcast %94 : vector<1x512xbf16> to vector<16x512xbf16>
    %96 = arith.mulf %93, %95 : vector<16x512xbf16>
    %c0_65 = arith.constant 0 : index
    %c143_66 = arith.constant 143 : index
    %97 = vector.load %arg9[%c0_65, %c143_66] : memref<16x768xbf16, #tpu.memory_space<vmem>>, vector<16x512xbf16>
    %c6_67 = arith.constant 6 : index
    %c0_68 = arith.constant 0 : index
    %98 = vector.load %arg1[%c6_67, %c0_68] : memref<9x512xbf16, #tpu.memory_space<vmem>>, vector<1x512xbf16>
    %99 = vector.broadcast %98 : vector<1x512xbf16> to vector<16x512xbf16>
    %100 = arith.mulf %97, %99 : vector<16x512xbf16>
    %c0_69 = arith.constant 0 : index
    %c144_70 = arith.constant 144 : index
    %101 = vector.load %arg9[%c0_69, %c144_70] : memref<16x768xbf16, #tpu.memory_space<vmem>>, vector<16x512xbf16>
    %c7_71 = arith.constant 7 : index
    %c0_72 = arith.constant 0 : index
    %102 = vector.load %arg1[%c7_71, %c0_72] : memref<9x512xbf16, #tpu.memory_space<vmem>>, vector<1x512xbf16>
    %103 = vector.broadcast %102 : vector<1x512xbf16> to vector<16x512xbf16>
    %104 = arith.mulf %101, %103 : vector<16x512xbf16>
    %c0_73 = arith.constant 0 : index
    %c145_74 = arith.constant 145 : index
    %105 = vector.load %arg9[%c0_73, %c145_74] : memref<16x768xbf16, #tpu.memory_space<vmem>>, vector<16x512xbf16>
    %c8_75 = arith.constant 8 : index
    %c0_76 = arith.constant 0 : index
    %106 = vector.load %arg1[%c8_75, %c0_76] : memref<9x512xbf16, #tpu.memory_space<vmem>>, vector<1x512xbf16>
    %107 = vector.broadcast %106 : vector<1x512xbf16> to vector<16x512xbf16>
    %108 = arith.mulf %105, %107 : vector<16x512xbf16>
    %109 = tpu.concatenate %79, %83, %87, %91, %92, %96, %100, %104, %108 in 0 : vector<16x512xbf16>, vector<16x512xbf16>, vector<16x512xbf16>, vector<16x512xbf16>, vector<16x512xbf16>, vector<16x512xbf16>, vector<16x512xbf16>, vector<16x512xbf16>, vector<16x512xbf16> -> vector<144x512xbf16>
    %cst_77 = arith.constant dense<0.000000e+00> : vector<16x512xf32>
    %110 = tpu.matmul %75, %109, %cst_77 {dimension_numbers = #tpu.dot_dimension_numbers<[1], [0], [0], [1], [0, 0, 1, 1], [], []>} : vector<16x144xbf16>, vector<144x512xbf16>, vector<16x512xf32> -> vector<16x512xf32>
    %cst_78 = arith.constant dense<0.000000e+00> : vector<16xf32>
    %111 = vector.multi_reduction <add>, %110, %cst_78 [1] : vector<16x512xf32> to vector<16xf32>
    %112 = vector.shape_cast %111 : vector<16xf32> to vector<16x1xf32>
    %113 = arith.addf %73, %112 : vector<16x1xf32>
    %114 = arith.mulf %110, %110 : vector<16x512xf32>
    %cst_79 = arith.constant dense<0.000000e+00> : vector<16xf32>
    %115 = vector.multi_reduction <add>, %114, %cst_79 [1] : vector<16x512xf32> to vector<16xf32>
    %116 = vector.shape_cast %115 : vector<16xf32> to vector<16x1xf32>
    %117 = arith.addf %74, %116 : vector<16x1xf32>
    %cst_80 = arith.constant 0.001953125 : f32
    %118 = vector.broadcast %cst_80 : f32 to vector<16x1xf32>
    %119 = arith.mulf %113, %118 : vector<16x1xf32>
    %cst_81 = arith.constant 0.001953125 : f32
    %120 = vector.broadcast %cst_81 : f32 to vector<16x1xf32>
    %121 = arith.mulf %117, %120 : vector<16x1xf32>
    %122 = arith.mulf %119, %119 : vector<16x1xf32>
    %123 = arith.subf %121, %122 : vector<16x1xf32>
    %cst_82 = arith.constant 0.000000e+00 : f32
    %124 = vector.broadcast %cst_82 : f32 to vector<16x1xf32>
    %125 = arith.maximumf %123, %124 : vector<16x1xf32>
    %c0_83 = arith.constant 0 : index
    %c0_84 = arith.constant 0 : index
    %126 = vector.load %arg6[%c0_83, %c0_84] : memref<16x1xf32, #tpu.memory_space<vmem>>, vector<16x1xf32>
    %cst_85 = arith.constant 9.99999974E-6 : f32
    %127 = vector.broadcast %cst_85 : f32 to vector<16x1xf32>
    %128 = arith.addf %125, %127 : vector<16x1xf32>
    %129 = math.rsqrt %128 : vector<16x1xf32>
    %130 = arith.mulf %126, %129 : vector<16x1xf32>
    %c0_86 = arith.constant 0 : index
    %c0_87 = arith.constant 0 : index
    %131 = vector.load %arg7[%c0_86, %c0_87] : memref<16x1xf32, #tpu.memory_space<vmem>>, vector<16x1xf32>
    %132 = arith.mulf %119, %130 : vector<16x1xf32>
    %133 = arith.subf %131, %132 : vector<16x1xf32>
    %134 = vector.broadcast %130 : vector<16x1xf32> to vector<16x512xf32>
    %135 = arith.mulf %110, %134 : vector<16x512xf32>
    %136 = vector.broadcast %133 : vector<16x1xf32> to vector<16x512xf32>
    %137 = arith.addf %135, %136 : vector<16x512xf32>
    %cst_88 = arith.constant 0.000000e+00 : f32
    %138 = vector.broadcast %cst_88 : f32 to vector<16x512xf32>
    %139 = arith.maximumf %137, %138 : vector<16x512xf32>
    %c0_89 = arith.constant 0 : index
    %c0_90 = arith.constant 0 : index
    %140 = vector.load %arg8[%c0_89, %c0_90] : memref<16x512xf32, #tpu.memory_space<vmem>>, vector<16x512xf32>
    tpu.vector_store %arg8[%c0_89, %c0_90], %139 {strides = array<i32>} : memref<16x512xf32, #tpu.memory_space<vmem>>, vector<16x512xf32>,
    return
  }
}

</mosaic_0001>

<llo_original>
// kernel: tpu_custom_call.1
$region0: #{tpu_custom_call.1}
  #allocation0 [shape = 'u32[]', space=smem, size = 0x4, offset = 0x4, fixed_abs, tag = 'smem constant byte address 0x4 - core index']
  #allocation1 [shape = 'u32[72,128]{1,0:T(1,128)}', space=vmem, size = 0x9000, scoped, tag = 'internal scratch']
  #allocation2 [shape = 'bf16[16,768]{1,0:T(8,128)(2,1)}', space=vmem, size = 0x6000, scoped, tag = 'scratch operand']
  #allocation3 [shape = 'f32[16,512]{1,0:T(8,128)}', space=vmem, size = 0x8000, scoped, tag = 'scratch operand']
  %s0 = inlined_call_operand.hbm [shape: bf16[16,768], index: 0, kind: input, shape index: {}]
  %s1 = inlined_call_operand.vmem [shape: bf16[9,512], index: 1, kind: input, shape index: {}]
  %s2 = inlined_call_operand.vmem [shape: bf16[16,144], index: 2, kind: input, shape index: {}]
  %s3 = inlined_call_operand.vmem [shape: f32[16,1], index: 3, kind: input, shape index: {}]
  %s4 = inlined_call_operand.vmem [shape: f32[16,1], index: 4, kind: input, shape index: {}]
  %s5 = inlined_call_operand.vmem [shape: bf16[16,144], index: 5, kind: input, shape index: {}]
  %s6 = inlined_call_operand.vmem [shape: f32[16,1], index: 6, kind: input, shape index: {}]
  %s7 = inlined_call_operand.vmem [shape: f32[16,1], index: 7, kind: input, shape index: {}]
  %s8 = inlined_call_operand.hbm [shape: f32[16,512], index: 8, kind: output, shape index: {}]
  %s9 = sld [smem:[#allocation0]]
  $region46: #{tpu_custom_call.1} parent=0
    _
  %s11 = ssub.s32 1, %s9
  %s12 = scalar_select 0, %s11, %s9
  $region1: #{tpu_custom_call.1} parent=0
    #allocation4 [shape = 'u8[24576]{0}', space=vmem, size = 0x6000, scoped, tag = 'input window, operand 0, single buffered']
    #allocation5 [shape = 's32[1]{0}', space=sflag, size = 0x4, scoped, tag = 'scoped memory for tpu_custom_call.1']
    #allocation6 [shape = 's32[1]{0}', space=sflag, size = 0x4, scoped, tag = 'scoped memory for tpu_custom_call.1']
    #allocation7 [shape = 'u8[32768]{0}', space=vmem, size = 0x8000, scoped, tag = 'output window, operand 0, single buffered']
    %13 = vsyncpa [#allocation5], 0
    %14 = vsyncpa [#allocation6], 0
    // Predicated region
    $region2: #{tpu_custom_call.1} parent=1 // pred_check
      _
    $region3: #{tpu_custom_call.1} parent=1 // pred_check_branch
      %16 = sbr.rel (0) target = $region5
    $region4: #{tpu_custom_call.1} parent=1 // pred_region
      %18 = vsyncadd [#allocation5], 0
      %s19 = sshll.u32 %s0, 4
      %s20 = int_to_ptr.hbm [resolvable:$true] %s19
      %s21 = sshll.u32 [#allocation4], 4
      %s22 = int_to_ptr.vmem [resolvable:$true] %s21
      %27 = dma.hbm_to_vmem [thread:$0]  %s20, 768, %s22, [#allocation5], 384, 384, 24
    $region5: #{tpu_custom_call.1} parent=1 // pred_fallthru
      _
    // Predicated region
    $region6: #{tpu_custom_call.1} parent=1 // pred_check
      _
    $region7: #{tpu_custom_call.1} parent=1 // pred_check_branch
      %29 = sbr.rel (0) target = $region9
    $region8: #{tpu_custom_call.1} parent=1 // pred_region
      _
    $region9: #{tpu_custom_call.1} parent=1 // pred_fallthru
      _
    // Predicated region
    $region10: #{tpu_custom_call.1} parent=1 // pred_check
      _
    $region11: #{tpu_custom_call.1} parent=1 // pred_check_branch
      %31 = sbr.rel (0) target = $region13
    $region12: #{tpu_custom_call.1} parent=1 // pred_region
      _
    $region13: #{tpu_custom_call.1} parent=1 // pred_fallthru
      _
    // Predicated region
    $region14: #{tpu_custom_call.1} parent=1 // pred_check
      _
    $region15: #{tpu_custom_call.1} parent=1 // pred_check_branch
      %33 = sbr.rel (0) target = $region17
    $region16: #{tpu_custom_call.1} parent=1 // pred_region
      _
    $region17: #{tpu_custom_call.1} parent=1 // pred_fallthru
      _
    // Predicated region
    $region18: #{tpu_custom_call.1} parent=1 // pred_check
      _
    $region19: #{tpu_custom_call.1} parent=1 // pred_check_branch
      %35 = sbr.rel (0) target = $region21
    $region20: #{tpu_custom_call.1} parent=1 // pred_region
      _
    $region21: #{tpu_custom_call.1} parent=1 // pred_fallthru
      _
    // Predicated region
    $region22: #{tpu_custom_call.1} parent=1 // pred_check
      _
    $region23: #{tpu_custom_call.1} parent=1 // pred_check_branch
      %37 = sbr.rel (0) target = $region25
    $region24: #{tpu_custom_call.1} parent=1 // pred_region
      _
    $region25: #{tpu_custom_call.1} parent=1 // pred_fallthru
      _
    // Predicated region
    $region26: #{tpu_custom_call.1} parent=1 // pred_check
      _
    $region27: #{tpu_custom_call.1} parent=1 // pred_check_branch
      %39 = sbr.rel (0) target = $region29
    $region28: #{tpu_custom_call.1} parent=1 // pred_region
      _
    $region29: #{tpu_custom_call.1} parent=1 // pred_fallthru
      _
    // Predicated region
    $region30: #{tpu_custom_call.1} parent=1 // pred_check
      _
    $region31: #{tpu_custom_call.1} parent=1 // pred_check_branch
      %41 = sbr.rel (0) target = $region33
    $region32: #{tpu_custom_call.1} parent=1 // pred_region
      _
    $region33: #{tpu_custom_call.1} parent=1 // pred_fallthru
      _
    // Predicated region
    $region34: #{tpu_custom_call.1} parent=1 // pred_check
      _
    $region35: #{tpu_custom_call.1} parent=1 // pred_check_branch
      %43 = sbr.rel (0) target = $region37
    $region36: #{tpu_custom_call.1} parent=1 // pred_region
      %45 = dma.done [#allocation5], 768
    $region37: #{tpu_custom_call.1} parent=1 // pred_fallthru
      _
    %47 = vst [vmem:[#allocation2] sm:$0xf] 0
    %48 = vst [vmem:[#allocation2 + $0x18] sm:$0xf] 0
    %49 = vst [vmem:[#allocation2 + $0x14] sm:$0xf] 0
    %50 = vst [vmem:[#allocation2 + $0x2c] sm:$0xf] 0
    %v51 = vld [vmem:[%s2] sm:$0xff]
    %v52 = vld [vmem:[%s2 + $0x8] sm:$0xff]
    %v53 = vld [vmem:[#allocation4] sm:$0xff]
    %v54 = vld [vmem:[#allocation4 + $0x8] sm:$0xff]
    %v55 = vld [vmem:[#allocation4 + $0x10] sm:$0xf]
    %v56 = vld [vmem:[#allocation4 + $0x18] sm:$0xff]
    %v57 = vld [vmem:[#allocation4 + $0x20] sm:$0xff]
    %v58 = vld [vmem:[#allocation4 + $0x28] sm:$0xf]
    %v59 = vld [vmem:[%s1] sm:$0x11]
    %v60 = vld [vmem:[%s1 + $0x8] sm:$0x11]
    %v63 = vunpack.c.l.b16 %v59
    %v64 = vunpack.c.h.b16 %v59
    %v65 = vunpack.c.l.b16 %v60
    %v66 = vunpack.c.h.b16 %v60
    %v67 = vpack.c.b16 %v63, %v63
    %v68 = vpack.c.b16 %v64, %v64
    %v69 = vpack.c.b16 %v65, %v65
    %v70 = vpack.c.b16 %v66, %v66
    %v72 = vpack.i.b16 %v67, %v67
    %v74 = vperm.slane %v72, 0
    %v76 = vpack.i.b16 %v68, %v68
    %v78 = vperm.slane %v76, 0
    %v80 = vpack.i.b16 %v69, %v69
    %v82 = vperm.slane %v80, 0
    %v84 = vpack.i.b16 %v70, %v70
    %v86 = vperm.slane %v84, 0
    %v87 = vunpack.c.l.bf16 %v53
    %v88 = vunpack.c.h.bf16 %v53
    %v89 = vunpack.c.l.bf16 %v54
    %v90 = vunpack.c.h.bf16 %v54
    %v91 = vunpack.c.l.bf16 %v55
    %v92 = vunpack.c.l.bf16 %v56
    %v93 = vunpack.c.h.bf16 %v56
    %v94 = vunpack.c.l.bf16 %v57
    %v95 = vunpack.c.h.bf16 %v57
    %v96 = vunpack.c.l.bf16 %v58
    %v97 = vunpack.c.l.bf16 %v74
    %v98 = vunpack.c.l.bf16 %v78
    %v99 = vunpack.c.l.bf16 %v82
    %v100 = vunpack.c.l.bf16 %v86
    %105 = vrot.lane.b32.xlu0 %v97, 111
    %v106 = vpop.permute.xlu0 %105
    %107 = vrot.lane.b32.xlu0 %v98, 111
    %v108 = vpop.permute.xlu0 %107
    %109 = vrot.lane.b32.xlu0 %v99, 111
    %v110 = vpop.permute.xlu0 %109
    %111 = vrot.lane.b32.xlu0 %v100, 111
    %v112 = vpop.permute.xlu0 %111
    %vm113 = vcmask 908288
    %v114 = vsel %vm113, %v106, %v108
    %v115 = vsel %vm113, %v108, %v110
    %v116 = vsel %vm113, %v110, %v112
    %v122 = vmul.f32 %v87, %v106
    %v123 = vmul.f32 %v88, %v114
    %v124 = vmul.f32 %v89, %v115
    %v125 = vmul.f32 %v90, %v116
    %v126 = vmul.f32 %v91, %v112
    %v127 = vmul.f32 %v92, %v106
    %v128 = vmul.f32 %v93, %v114
    %v129 = vmul.f32 %v94, %v115
    %v130 = vmul.f32 %v95, %v116
    %v131 = vmul.f32 %v96, %v112
    %v132 = vpack.c.bf16 %v123, %v122
    %v133 = vpack.c.bf16 %v125, %v124
    %v134 = vpack.c.bf16 %v126, %v126
    %v135 = vpack.c.bf16 %v128, %v127
    %v136 = vpack.c.bf16 %v130, %v129
    %v137 = vpack.c.bf16 %v131, %v131
    %v138 = vshrl.u32 %v67, 16
    %v139 = vpack.i.b16 %v138, %v138
    %v141 = vperm.slane %v139, 0
    %v142 = vshrl.u32 %v68, 16
    %v143 = vpack.i.b16 %v142, %v142
    %v145 = vperm.slane %v143, 0
    %v146 = vshrl.u32 %v69, 16
    %v147 = vpack.i.b16 %v146, %v146
    %v149 = vperm.slane %v147, 0
    %v150 = vshrl.u32 %v70, 16
    %v151 = vpack.i.b16 %v150, %v150
    %v153 = vperm.slane %v151, 0
    %v154 = vunpack.c.l.bf16 %v141
    %v155 = vunpack.c.l.bf16 %v145
    %v156 = vunpack.c.l.bf16 %v149
    %v157 = vunpack.c.l.bf16 %v153
    %162 = vrot.lane.b32.xlu0 %v154, 112
    %v163 = vpop.permute.xlu0 %162
    %164 = vrot.lane.b32.xlu0 %v155, 112
    %v165 = vpop.permute.xlu0 %164
    %166 = vrot.lane.b32.xlu0 %v156, 112
    %v167 = vpop.permute.xlu0 %166
    %168 = vrot.lane.b32.xlu0 %v157, 112
    %v169 = vpop.permute.xlu0 %168
    %vm170 = vcmask 916480
    %v171 = vsel %vm170, %v163, %v165
    %v172 = vsel %vm170, %v165, %v167
    %v173 = vsel %vm170, %v167, %v169
    %v179 = vmul.f32 %v87, %v163
    %v180 = vmul.f32 %v88, %v171
    %v181 = vmul.f32 %v89, %v172
    %v182 = vmul.f32 %v90, %v173
    %v183 = vmul.f32 %v91, %v169
    %v184 = vmul.f32 %v92, %v163
    %v185 = vmul.f32 %v93, %v171
    %v186 = vmul.f32 %v94, %v172
    %v187 = vmul.f32 %v95, %v173
    %v188 = vmul.f32 %v96, %v169
    %v189 = vpack.c.bf16 %v180, %v179
    %v190 = vpack.c.bf16 %v182, %v181
    %v191 = vpack.c.bf16 %v183, %v183
    %v192 = vpack.c.bf16 %v185, %v184
    %v193 = vpack.c.bf16 %v187, %v186
    %v194 = vpack.c.bf16 %v188, %v188
    %v195 = vld [vmem:[%s1] sm:$0x22]
    %v196 = vld [vmem:[%s1 + $0x8] sm:$0x22]
    %v199 = vunpack.c.l.b16 %v195
    %v200 = vunpack.c.h.b16 %v195
    %v201 = vunpack.c.l.b16 %v196
    %v202 = vunpack.c.h.b16 %v196
    %v203 = vpack.c.b16 %v199, %v199
    %v204 = vpack.c.b16 %v200, %v200
    %v205 = vpack.c.b16 %v201, %v201
    %v206 = vpack.c.b16 %v202, %v202
    %v208 = vpack.i.b16 %v203, %v203
    %v210 = vperm.slane %v208, 1
    %v212 = vpack.i.b16 %v204, %v204
    %v214 = vperm.slane %v212, 1
    %v216 = vpack.i.b16 %v205, %v205
    %v218 = vperm.slane %v216, 1
    %v220 = vpack.i.b16 %v206, %v206
    %v222 = vperm.slane %v220, 1
    %v223 = vunpack.c.l.bf16 %v210
    %v224 = vunpack.c.l.bf16 %v214
    %v225 = vunpack.c.l.bf16 %v218
    %v226 = vunpack.c.l.bf16 %v222
    %231 = vrot.lane.b32.xlu0 %v223, 113
    %v232 = vpop.permute.xlu0 %231
    %233 = vrot.lane.b32.xlu0 %v224, 113
    %v234 = vpop.permute.xlu0 %233
    %235 = vrot.lane.b32.xlu0 %v225, 113
    %v236 = vpop.permute.xlu0 %235
    %237 = vrot.lane.b32.xlu0 %v226, 113
    %v238 = vpop.permute.xlu0 %237
    %vm239 = vcmask 924672
    %v240 = vsel %vm239, %v232, %v234
    %v241 = vsel %vm239, %v234, %v236
    %v242 = vsel %vm239, %v236, %v238
    %v248 = vmul.f32 %v87, %v232
    %v249 = vmul.f32 %v88, %v240
    %v250 = vmul.f32 %v89, %v241
    %v251 = vmul.f32 %v90, %v242
    %v252 = vmul.f32 %v91, %v238
    %v253 = vmul.f32 %v92, %v232
    %v254 = vmul.f32 %v93, %v240
    %v255 = vmul.f32 %v94, %v241
    %v256 = vmul.f32 %v95, %v242
    %v257 = vmul.f32 %v96, %v238
    %v258 = vpack.c.bf16 %v249, %v248
    %v259 = vpack.c.bf16 %v251, %v250
    %v260 = vpack.c.bf16 %v252, %v252
    %v261 = vpack.c.bf16 %v254, %v253
    %v262 = vpack.c.bf16 %v256, %v255
    %v263 = vpack.c.bf16 %v257, %v257
    %v264 = vshrl.u32 %v203, 16
    %v265 = vpack.i.b16 %v264, %v264
    %v267 = vperm.slane %v265, 1
    %v268 = vshrl.u32 %v204, 16
    %v269 = vpack.i.b16 %v268, %v268
    %v271 = vperm.slane %v269, 1
    %v272 = vshrl.u32 %v205, 16
    %v273 = vpack.i.b16 %v272, %v272
    %v275 = vperm.slane %v273, 1
    %v276 = vshrl.u32 %v206, 16
    %v277 = vpack.i.b16 %v276, %v276
    %v279 = vperm.slane %v277, 1
    %v280 = vunpack.c.l.bf16 %v267
    %v281 = vunpack.c.l.bf16 %v271
    %v282 = vunpack.c.l.bf16 %v275
    %v283 = vunpack.c.l.bf16 %v279
    %288 = vrot.lane.b32.xlu0 %v280, 127
    %v289 = vpop.permute.xlu0 %288
    %290 = vrot.lane.b32.xlu0 %v281, 127
    %v291 = vpop.permute.xlu0 %290
    %292 = vrot.lane.b32.xlu0 %v282, 127
    %v293 = vpop.permute.xlu0 %292
    %294 = vrot.lane.b32.xlu0 %v283, 127
    %v295 = vpop.permute.xlu0 %294
    %vm296 = vcmask 1039360
    %v297 = vsel %vm296, %v289, %v291
    %v298 = vsel %vm296, %v291, %v293
    %v299 = vsel %vm296, %v293, %v295
    %v305 = vmul.f32 %v87, %v289
    %v306 = vmul.f32 %v88, %v297
    %v307 = vmul.f32 %v89, %v298
    %v308 = vmul.f32 %v90, %v299
    %v309 = vmul.f32 %v91, %v295
    %v310 = vmul.f32 %v92, %v289
    %v311 = vmul.f32 %v93, %v297
    %v312 = vmul.f32 %v94, %v298
    %v313 = vmul.f32 %v95, %v299
    %v314 = vmul.f32 %v96, %v295
    %v315 = vpack.c.bf16 %v306, %v305
    %v316 = vpack.c.bf16 %v308, %v307
    %v317 = vpack.c.bf16 %v309, %v309
    %v318 = vpack.c.bf16 %v311, %v310
    %v319 = vpack.c.bf16 %v313, %v312
    %v320 = vpack.c.bf16 %v314, %v314
    %v321 = vld [vmem:[#allocation4 + $0x4] sm:$0xff]
    %v322 = vld [vmem:[#allocation4 + $0xc] sm:$0xff]
    %v323 = vld [vmem:[#allocation4 + $0x1c] sm:$0xff]
    %v324 = vld [vmem:[#allocation4 + $0x24] sm:$0xff]
    %v325 = vld [vmem:[#allocation4 + $0x4] sm:$0xff]
    %v326 = vld [vmem:[#allocation4 + $0xc] sm:$0xff]
    %v327 = vld [vmem:[#allocation4 + $0x14] sm:$0xf]
    %v328 = vld [vmem:[#allocation4 + $0x1c] sm:$0xff]
    %v329 = vld [vmem:[#allocation4 + $0x24] sm:$0xff]
    %v330 = vld [vmem:[#allocation4 + $0x2c] sm:$0xf]
    %v331 = vld [vmem:[%s1] sm:$0x44]
    %v332 = vld [vmem:[%s1 + $0x8] sm:$0x44]
    %v335 = vunpack.c.l.b16 %v331
    %v336 = vunpack.c.h.b16 %v331
    %v337 = vunpack.c.l.b16 %v332
    %v338 = vunpack.c.h.b16 %v332
    %v339 = vpack.c.b16 %v335, %v335
    %v340 = vpack.c.b16 %v336, %v336
    %v341 = vpack.c.b16 %v337, %v337
    %v342 = vpack.c.b16 %v338, %v338
    %v344 = vshrl.u32 %v339, 16
    %v345 = vpack.i.b16 %v344, %v344
    %v347 = vperm.slane %v345, 2
    %v349 = vshrl.u32 %v340, 16
    %v350 = vpack.i.b16 %v349, %v349
    %v352 = vperm.slane %v350, 2
    %v354 = vshrl.u32 %v341, 16
    %v355 = vpack.i.b16 %v354, %v354
    %v357 = vperm.slane %v355, 2
    %v359 = vshrl.u32 %v342, 16
    %v360 = vpack.i.b16 %v359, %v359
    %v362 = vperm.slane %v360, 2
    %v363 = vunpack.c.l.bf16 %v325
    %v364 = vunpack.c.h.bf16 %v325
    %v365 = vunpack.c.l.bf16 %v326
    %v366 = vunpack.c.h.bf16 %v326
    %v367 = vunpack.c.l.bf16 %v327
    %v368 = vunpack.c.l.bf16 %v328
    %v369 = vunpack.c.h.bf16 %v328
    %v370 = vunpack.c.l.bf16 %v329
    %v371 = vunpack.c.h.bf16 %v329
    %v372 = vunpack.c.l.bf16 %v330
    %v373 = vunpack.c.l.bf16 %v347
    %v374 = vunpack.c.l.bf16 %v352
    %v375 = vunpack.c.l.bf16 %v357
    %v376 = vunpack.c.l.bf16 %v362
    %381 = vrot.lane.b32.xlu0 %v373, 1
    %v382 = vpop.permute.xlu0 %381
    %383 = vrot.lane.b32.xlu0 %v374, 1
    %v384 = vpop.permute.xlu0 %383
    %385 = vrot.lane.b32.xlu0 %v375, 1
    %v386 = vpop.permute.xlu0 %385
    %387 = vrot.lane.b32.xlu0 %v376, 1
    %v388 = vpop.permute.xlu0 %387
    %vm389 = vcmask 7168
    %v390 = vsel %vm389, %v382, %v384
    %v391 = vsel %vm389, %v384, %v386
    %v392 = vsel %vm389, %v386, %v388
    %v398 = vmul.f32 %v363, %v382
    %v399 = vmul.f32 %v364, %v390
    %v400 = vmul.f32 %v365, %v391
    %v401 = vmul.f32 %v366, %v392
    %v402 = vmul.f32 %v367, %v388
    %v403 = vmul.f32 %v368, %v382
    %v404 = vmul.f32 %v369, %v390
    %v405 = vmul.f32 %v370, %v391
    %v406 = vmul.f32 %v371, %v392
    %v407 = vmul.f32 %v372, %v388
    %v408 = vpack.c.bf16 %v399, %v398
    %v409 = vpack.c.bf16 %v401, %v400
    %v410 = vpack.c.bf16 %v402, %v402
    %v411 = vpack.c.bf16 %v404, %v403
    %v412 = vpack.c.bf16 %v406, %v405
    %v413 = vpack.c.bf16 %v407, %v407
    %v414 = vld [vmem:[%s1] sm:$0x88]
    %v415 = vld [vmem:[%s1 + $0x8] sm:$0x88]
    %v418 = vunpack.c.l.b16 %v414
    %v419 = vunpack.c.h.b16 %v414
    %v420 = vunpack.c.l.b16 %v415
    %v421 = vunpack.c.h.b16 %v415
    %v422 = vpack.c.b16 %v418, %v418
    %v423 = vpack.c.b16 %v419, %v419
    %v424 = vpack.c.b16 %v420, %v420
    %v425 = vpack.c.b16 %v421, %v421
    %v427 = vpack.i.b16 %v422, %v422
    %v429 = vperm.slane %v427, 3
    %v431 = vpack.i.b16 %v423, %v423
    %v433 = vperm.slane %v431, 3
    %v435 = vpack.i.b16 %v424, %v424
    %v437 = vperm.slane %v435, 3
    %v439 = vpack.i.b16 %v425, %v425
    %v441 = vperm.slane %v439, 3
    %v442 = vunpack.c.l.bf16 %v429
    %v443 = vunpack.c.l.bf16 %v433
    %v444 = vunpack.c.l.bf16 %v437
    %v445 = vunpack.c.l.bf16 %v441
    %450 = vrot.lane.b32.xlu0 %v442, 15
    %v451 = vpop.permute.xlu0 %450
    %452 = vrot.lane.b32.xlu0 %v443, 15
    %v453 = vpop.permute.xlu0 %452
    %454 = vrot.lane.b32.xlu0 %v444, 15
    %v455 = vpop.permute.xlu0 %454
    %456 = vrot.lane.b32.xlu0 %v445, 15
    %v457 = vpop.permute.xlu0 %456
    %vm458 = vcmask 121856
    %v459 = vsel %vm458, %v451, %v453
    %v460 = vsel %vm458, %v453, %v455
    %v461 = vsel %vm458, %v455, %v457
    %v467 = vmul.f32 %v363, %v451
    %v468 = vmul.f32 %v364, %v459
    %v469 = vmul.f32 %v365, %v460
    %v470 = vmul.f32 %v366, %v461
    %v471 = vmul.f32 %v367, %v457
    %v472 = vmul.f32 %v368, %v451
    %v473 = vmul.f32 %v369, %v459
    %v474 = vmul.f32 %v370, %v460
    %v475 = vmul.f32 %v371, %v461
    %v476 = vmul.f32 %v372, %v457
    %v477 = vpack.c.bf16 %v468, %v467
    %v478 = vpack.c.bf16 %v470, %v469
    %v479 = vpack.c.bf16 %v471, %v471
    %v480 = vpack.c.bf16 %v473, %v472
    %v481 = vpack.c.bf16 %v475, %v474
    %v482 = vpack.c.bf16 %v476, %v476
    %v483 = vshrl.u32 %v422, 16
    %v484 = vpack.i.b16 %v483, %v483
    %v486 = vperm.slane %v484, 3
    %v487 = vshrl.u32 %v423, 16
    %v488 = vpack.i.b16 %v487, %v487
    %v490 = vperm.slane %v488, 3
    %v491 = vshrl.u32 %v424, 16
    %v492 = vpack.i.b16 %v491, %v491
    %v494 = vperm.slane %v492, 3
    %v495 = vshrl.u32 %v425, 16
    %v496 = vpack.i.b16 %v495, %v495
    %v498 = vperm.slane %v496, 3
    %v499 = vunpack.c.l.bf16 %v486
    %v500 = vunpack.c.l.bf16 %v490
    %v501 = vunpack.c.l.bf16 %v494
    %v502 = vunpack.c.l.bf16 %v498
    %507 = vrot.lane.b32.xlu0 %v499, 16
    %v508 = vpop.permute.xlu0 %507
    %509 = vrot.lane.b32.xlu0 %v500, 16
    %v510 = vpop.permute.xlu0 %509
    %511 = vrot.lane.b32.xlu0 %v501, 16
    %v512 = vpop.permute.xlu0 %511
    %513 = vrot.lane.b32.xlu0 %v502, 16
    %v514 = vpop.permute.xlu0 %513
    %vm515 = vcmask 130048
    %v516 = vsel %vm515, %v508, %v510
    %v517 = vsel %vm515, %v510, %v512
    %v518 = vsel %vm515, %v512, %v514
    %v524 = vmul.f32 %v363, %v508
    %v525 = vmul.f32 %v364, %v516
    %v526 = vmul.f32 %v365, %v517
    %v527 = vmul.f32 %v366, %v518
    %v528 = vmul.f32 %v367, %v514
    %v529 = vmul.f32 %v368, %v508
    %v530 = vmul.f32 %v369, %v516
    %v531 = vmul.f32 %v370, %v517
    %v532 = vmul.f32 %v371, %v518
    %v533 = vmul.f32 %v372, %v514
    %v534 = vpack.c.bf16 %v525, %v524
    %v535 = vpack.c.bf16 %v527, %v526
    %v536 = vpack.c.bf16 %v528, %v528
    %v537 = vpack.c.bf16 %v530, %v529
    %v538 = vpack.c.bf16 %v532, %v531
    %v539 = vpack.c.bf16 %v533, %v533
    %v540 = vld [vmem:[%s1 + $0x10] sm:$0x11]
    %v541 = vld [vmem:[%s1 + $0x18] sm:$0x11]
    %v544 = vunpack.c.l.b16 %v540
    %v545 = vunpack.c.h.b16 %v540
    %v546 = vunpack.c.l.b16 %v541
    %v547 = vunpack.c.h.b16 %v541
    %v548 = vpack.c.b16 %v544, %v544
    %v549 = vpack.c.b16 %v545, %v545
    %v550 = vpack.c.b16 %v546, %v546
    %v551 = vpack.c.b16 %v547, %v547
    %v553 = vpack.i.b16 %v548, %v548
    %v555 = vperm.slane %v553, 0
    %v557 = vpack.i.b16 %v549, %v549
    %v559 = vperm.slane %v557, 0
    %v561 = vpack.i.b16 %v550, %v550
    %v563 = vperm.slane %v561, 0
    %v565 = vpack.i.b16 %v551, %v551
    %v567 = vperm.slane %v565, 0
    %v568 = vunpack.c.l.bf16 %v555
    %v569 = vunpack.c.l.bf16 %v559
    %v570 = vunpack.c.l.bf16 %v563
    %v571 = vunpack.c.l.bf16 %v567
    %576 = vrot.lane.b32.xlu0 %v568, 17
    %v577 = vpop.permute.xlu0 %576
    %578 = vrot.lane.b32.xlu0 %v569, 17
    %v579 = vpop.permute.xlu0 %578
    %580 = vrot.lane.b32.xlu0 %v570, 17
    %v581 = vpop.permute.xlu0 %580
    %582 = vrot.lane.b32.xlu0 %v571, 17
    %v583 = vpop.permute.xlu0 %582
    %vm584 = vcmask 138240
    %v585 = vsel %vm584, %v577, %v579
    %v586 = vsel %vm584, %v579, %v581
    %v587 = vsel %vm584, %v581, %v583
    %v593 = vmul.f32 %v363, %v577
    %v594 = vmul.f32 %v364, %v585
    %v595 = vmul.f32 %v365, %v586
    %v596 = vmul.f32 %v366, %v587
    %v597 = vmul.f32 %v367, %v583
    %v598 = vmul.f32 %v368, %v577
    %v599 = vmul.f32 %v369, %v585
    %v600 = vmul.f32 %v370, %v586
    %v601 = vmul.f32 %v371, %v587
    %v602 = vmul.f32 %v372, %v583
    %v603 = vpack.c.bf16 %v594, %v593
    %v604 = vpack.c.bf16 %v596, %v595
    %v605 = vpack.c.bf16 %v597, %v597
    %v606 = vpack.c.bf16 %v599, %v598
    %v607 = vpack.c.bf16 %v601, %v600
    %v608 = vpack.c.bf16 %v602, %v602
    %v615 = vunpack.c.l.b16 %v132
    %v616 = vunpack.c.h.b16 %v132
    %v617 = vunpack.c.l.b16 %v133
    %v618 = vunpack.c.h.b16 %v133
    %v619 = vunpack.c.l.b16 %v134
    %v620 = vunpack.c.l.b16 %v135
    %v621 = vunpack.c.h.b16 %v135
    %v622 = vunpack.c.l.b16 %v136
    %v623 = vunpack.c.h.b16 %v136
    %v624 = vunpack.c.l.b16 %v137
    %v625 = vpack.c.b16 %v620, %v615
    %v626 = vpack.c.b16 %v621, %v616
    %v627 = vpack.c.b16 %v622, %v617
    %v628 = vpack.c.b16 %v623, %v618
    %v629 = vpack.c.b16 %v624, %v619
    %v636 = vunpack.c.l.b16 %v189
    %v637 = vunpack.c.h.b16 %v189
    %v638 = vunpack.c.l.b16 %v190
    %v639 = vunpack.c.h.b16 %v190
    %v640 = vunpack.c.l.b16 %v191
    %v641 = vunpack.c.l.b16 %v192
    %v642 = vunpack.c.h.b16 %v192
    %v643 = vunpack.c.l.b16 %v193
    %v644 = vunpack.c.h.b16 %v193
    %v645 = vunpack.c.l.b16 %v194
    %v646 = vpack.c.b16 %v641, %v636
    %v647 = vpack.c.b16 %v642, %v637
    %v648 = vpack.c.b16 %v643, %v638
    %v649 = vpack.c.b16 %v644, %v639
    %v650 = vpack.c.b16 %v645, %v640
    %651 = vrot.lane.b32.xlu0 %v646, 127
    %v652 = vpop.permute.xlu0 %651
    %653 = vrot.lane.b32.xlu0 %v647, 127
    %v654 = vpop.permute.xlu0 %653
    %655 = vrot.lane.b32.xlu0 %v648, 127
    %v656 = vpop.permute.xlu0 %655
    %657 = vrot.lane.b32.xlu0 %v649, 127
    %v658 = vpop.permute.xlu0 %657
    %659 = vrot.lane.b32.xlu0 %v650, 127
    %v660 = vpop.permute.xlu0 %659
    %vm661 = vcmask 1039360
    %v662 = vsel %vm661, %v652, %v654
    %v663 = vsel %vm661, %v654, %v656
    %v664 = vsel %vm661, %v656, %v658
    %v665 = vsel %vm661, %v658, %v660
    %v672 = vunpack.c.l.b16 %v258
    %v673 = vunpack.c.h.b16 %v258
    %v674 = vunpack.c.l.b16 %v259
    %v675 = vunpack.c.h.b16 %v259
    %v676 = vunpack.c.l.b16 %v260
    %v677 = vunpack.c.l.b16 %v261
    %v678 = vunpack.c.h.b16 %v261
    %v679 = vunpack.c.l.b16 %v262
    %v680 = vunpack.c.h.b16 %v262
    %v681 = vunpack.c.l.b16 %v263
    %v682 = vpack.c.b16 %v677, %v672
    %v683 = vpack.c.b16 %v678, %v673
    %v684 = vpack.c.b16 %v679, %v674
    %v685 = vpack.c.b16 %v680, %v675
    %v686 = vpack.c.b16 %v681, %v676
    %687 = vrot.lane.b32.xlu0 %v682, 126
    %v688 = vpop.permute.xlu0 %687
    %689 = vrot.lane.b32.xlu0 %v683, 126
    %v690 = vpop.permute.xlu0 %689
    %691 = vrot.lane.b32.xlu0 %v684, 126
    %v692 = vpop.permute.xlu0 %691
    %693 = vrot.lane.b32.xlu0 %v685, 126
    %v694 = vpop.permute.xlu0 %693
    %695 = vrot.lane.b32.xlu0 %v686, 126
    %v696 = vpop.permute.xlu0 %695
    %vm697 = vcmask 1031168
    %v698 = vsel %vm697, %v688, %v690
    %v699 = vsel %vm697, %v690, %v692
    %v700 = vsel %vm697, %v692, %v694
    %v701 = vsel %vm697, %v694, %v696
    %v708 = vunpack.c.l.b16 %v315
    %v709 = vunpack.c.h.b16 %v315
    %v710 = vunpack.c.l.b16 %v316
    %v711 = vunpack.c.h.b16 %v316
    %v712 = vunpack.c.l.b16 %v317
    %v713 = vunpack.c.l.b16 %v318
    %v714 = vunpack.c.h.b16 %v318
    %v715 = vunpack.c.l.b16 %v319
    %v716 = vunpack.c.h.b16 %v319
    %v717 = vunpack.c.l.b16 %v320
    %v718 = vpack.c.b16 %v713, %v708
    %v719 = vpack.c.b16 %v714, %v709
    %v720 = vpack.c.b16 %v715, %v710
    %v721 = vpack.c.b16 %v716, %v711
    %v722 = vpack.c.b16 %v717, %v712
    %723 = vrot.lane.b32.xlu0 %v718, 112
    %v724 = vpop.permute.xlu0 %723
    %725 = vrot.lane.b32.xlu0 %v719, 112
    %v726 = vpop.permute.xlu0 %725
    %727 = vrot.lane.b32.xlu0 %v720, 112
    %v728 = vpop.permute.xlu0 %727
    %729 = vrot.lane.b32.xlu0 %v721, 112
    %v730 = vpop.permute.xlu0 %729
    %731 = vrot.lane.b32.xlu0 %v722, 112
    %v732 = vpop.permute.xlu0 %731
    %vm733 = vcmask 916480
    %v734 = vsel %vm733, %v724, %v726
    %v735 = vsel %vm733, %v726, %v728
    %v736 = vsel %vm733, %v728, %v730
    %v737 = vsel %vm733, %v730, %v732
    %v742 = vunpack.c.l.b16 %v321
    %v743 = vunpack.c.h.b16 %v321
    %v744 = vunpack.c.l.b16 %v322
    %v745 = vunpack.c.h.b16 %v322
    %v746 = vunpack.c.l.b16 %v323
    %v747 = vunpack.c.h.b16 %v323
    %v748 = vunpack.c.l.b16 %v324
    %v749 = vunpack.c.h.b16 %v324
    %v750 = vpack.c.b16 %v746, %v742
    %v751 = vpack.c.b16 %v747, %v743
    %v752 = vpack.c.b16 %v748, %v744
    %v753 = vpack.c.b16 %v749, %v745
    %754 = vrot.lane.b32.xlu0 %v750, 111
    %v755 = vpop.permute.xlu0 %754
    %756 = vrot.lane.b32.xlu0 %v751, 111
    %v757 = vpop.permute.xlu0 %756
    %758 = vrot.lane.b32.xlu0 %v752, 111
    %v759 = vpop.permute.xlu0 %758
    %760 = vrot.lane.b32.xlu0 %v753, 111
    %v761 = vpop.permute.xlu0 %760
    %vm762 = vcmask 908288
    %v763 = vsel %vm762, %v755, %v757
    %v764 = vsel %vm762, %v757, %v759
    %v765 = vsel %vm762, %v759, %v761
    %v772 = vunpack.c.l.b16 %v408
    %v773 = vunpack.c.h.b16 %v408
    %v774 = vunpack.c.l.b16 %v409
    %v775 = vunpack.c.h.b16 %v409
    %v776 = vunpack.c.l.b16 %v410
    %v777 = vunpack.c.l.b16 %v411
    %v778 = vunpack.c.h.b16 %v411
    %v779 = vunpack.c.l.b16 %v412
    %v780 = vunpack.c.h.b16 %v412
    %v781 = vunpack.c.l.b16 %v413
    %v782 = vpack.c.b16 %v777, %v772
    %v783 = vpack.c.b16 %v778, %v773
    %v784 = vpack.c.b16 %v779, %v774
    %v785 = vpack.c.b16 %v780, %v775
    %v786 = vpack.c.b16 %v781, %v776
    %787 = vrot.lane.b32.xlu0 %v782, 110
    %v788 = vpop.permute.xlu0 %787
    %789 = vrot.lane.b32.xlu0 %v783, 110
    %v790 = vpop.permute.xlu0 %789
    %791 = vrot.lane.b32.xlu0 %v784, 110
    %v792 = vpop.permute.xlu0 %791
    %793 = vrot.lane.b32.xlu0 %v785, 110
    %v794 = vpop.permute.xlu0 %793
    %795 = vrot.lane.b32.xlu0 %v786, 110
    %v796 = vpop.permute.xlu0 %795
    %vm797 = vcmask 900096
    %v798 = vsel %vm797, %v788, %v790
    %v799 = vsel %vm797, %v790, %v792
    %v800 = vsel %vm797, %v792, %v794
    %v801 = vsel %vm797, %v794, %v796
    %v808 = vunpack.c.l.b16 %v477
    %v809 = vunpack.c.h.b16 %v477
    %v810 = vunpack.c.l.b16 %v478
    %v811 = vunpack.c.h.b16 %v478
    %v812 = vunpack.c.l.b16 %v479
    %v813 = vunpack.c.l.b16 %v480
    %v814 = vunpack.c.h.b16 %v480
    %v815 = vunpack.c.l.b16 %v481
    %v816 = vunpack.c.h.b16 %v481
    %v817 = vunpack.c.l.b16 %v482
    %v818 = vpack.c.b16 %v813, %v808
    %v819 = vpack.c.b16 %v814, %v809
    %v820 = vpack.c.b16 %v815, %v810
    %v821 = vpack.c.b16 %v816, %v811
    %v822 = vpack.c.b16 %v817, %v812
    %823 = vrot.lane.b32.xlu0 %v818, 96
    %v824 = vpop.permute.xlu0 %823
    %825 = vrot.lane.b32.xlu0 %v819, 96
    %v826 = vpop.permute.xlu0 %825
    %827 = vrot.lane.b32.xlu0 %v820, 96
    %v828 = vpop.permute.xlu0 %827
    %829 = vrot.lane.b32.xlu0 %v821, 96
    %v830 = vpop.permute.xlu0 %829
    %831 = vrot.lane.b32.xlu0 %v822, 96
    %v832 = vpop.permute.xlu0 %831
    %vm833 = vcmask 785408
    %v834 = vsel %vm833, %v824, %v826
    %v835 = vsel %vm833, %v826, %v828
    %v836 = vsel %vm833, %v828, %v830
    %v837 = vsel %vm833, %v830, %v832
    %v844 = vunpack.c.l.b16 %v534
    %v845 = vunpack.c.h.b16 %v534
    %v846 = vunpack.c.l.b16 %v535
    %v847 = vunpack.c.h.b16 %v535
    %v848 = vunpack.c.l.b16 %v536
    %v849 = vunpack.c.l.b16 %v537
    %v850 = vunpack.c.h.b16 %v537
    %v851 = vunpack.c.l.b16 %v538
    %v852 = vunpack.c.h.b16 %v538
    %v853 = vunpack.c.l.b16 %v539
    %v854 = vpack.c.b16 %v849, %v844
    %v855 = vpack.c.b16 %v850, %v845
    %v856 = vpack.c.b16 %v851, %v846
    %v857 = vpack.c.b16 %v852, %v847
    %v858 = vpack.c.b16 %v853, %v848
    %859 = vrot.lane.b32.xlu0 %v854, 95
    %v860 = vpop.permute.xlu0 %859
    %861 = vrot.lane.b32.xlu0 %v855, 95
    %v862 = vpop.permute.xlu0 %861
    %863 = vrot.lane.b32.xlu0 %v856, 95
    %v864 = vpop.permute.xlu0 %863
    %865 = vrot.lane.b32.xlu0 %v857, 95
    %v866 = vpop.permute.xlu0 %865
    %867 = vrot.lane.b32.xlu0 %v858, 95
    %v868 = vpop.permute.xlu0 %867
    %vm869 = vcmask 777216
    %v870 = vsel %vm869, %v860, %v862
    %v871 = vsel %vm869, %v862, %v864
    %v872 = vsel %vm869, %v864, %v866
    %v873 = vsel %vm869, %v866, %v868
    %v880 = vunpack.c.l.b16 %v603
    %v881 = vunpack.c.h.b16 %v603
    %v882 = vunpack.c.l.b16 %v604
    %v883 = vunpack.c.h.b16 %v604
    %v884 = vunpack.c.l.b16 %v605
    %v885 = vunpack.c.l.b16 %v606
    %v886 = vunpack.c.h.b16 %v606
    %v887 = vunpack.c.l.b16 %v607
    %v888 = vunpack.c.h.b16 %v607
    %v889 = vunpack.c.l.b16 %v608
    %v890 = vpack.c.b16 %v885, %v880
    %v891 = vpack.c.b16 %v886, %v881
    %v892 = vpack.c.b16 %v887, %v882
    %v893 = vpack.c.b16 %v888, %v883
    %v894 = vpack.c.b16 %v889, %v884
    %895 = vrot.lane.b32.xlu0 %v890, 94
    %v896 = vpop.permute.xlu0 %895
    %897 = vrot.lane.b32.xlu0 %v891, 94
    %v898 = vpop.permute.xlu0 %897
    %899 = vrot.lane.b32.xlu0 %v892, 94
    %v900 = vpop.permute.xlu0 %899
    %901 = vrot.lane.b32.xlu0 %v893, 94
    %v902 = vpop.permute.xlu0 %901
    %903 = vrot.lane.b32.xlu0 %v894, 94
    %v904 = vpop.permute.xlu0 %903
    %vm905 = vcmask 769024
    %v906 = vsel %vm905, %v896, %v898
    %v907 = vsel %vm905, %v898, %v900
    %v908 = vsel %vm905, %v900, %v902
    %v909 = vsel %vm905, %v902, %v904
    %v912 = vunpack.c.l.b16 %v51
    %v913 = vunpack.c.h.b16 %v51
    %v914 = vunpack.c.l.b16 %v52
    %v915 = vunpack.c.h.b16 %v52
    %v916 = vpack.c.b16 %v914, %v912
    %v917 = vpack.c.b16 %v915, %v913
    %919 = vrot.lane.b32.xlu0 %v625, 17
    %v920 = vpop.permute.xlu0 %919
    %921 = vrot.lane.b32.xlu0 %v626, 17
    %v922 = vpop.permute.xlu0 %921
    %923 = vrot.lane.b32.xlu0 %v627, 17
    %v924 = vpop.permute.xlu0 %923
    %925 = vrot.lane.b32.xlu0 %v628, 17
    %v926 = vpop.permute.xlu0 %925
    %927 = vrot.lane.b32.xlu0 %v629, 17
    %v928 = vpop.permute.xlu0 %927
    %929 = vrot.lane.b32.xlu0 %v662, 17
    %v930 = vpop.permute.xlu0 %929
    %931 = vrot.lane.b32.xlu0 %v663, 17
    %v932 = vpop.permute.xlu0 %931
    %933 = vrot.lane.b32.xlu0 %v664, 17
    %v934 = vpop.permute.xlu0 %933
    %935 = vrot.lane.b32.xlu0 %v665, 17
    %v936 = vpop.permute.xlu0 %935
    %937 = vrot.lane.b32.xlu0 %v660, 17
    %v938 = vpop.permute.xlu0 %937
    %939 = vrot.lane.b32.xlu0 %v698, 17
    %v940 = vpop.permute.xlu0 %939
    %941 = vrot.lane.b32.xlu0 %v699, 17
    %v942 = vpop.permute.xlu0 %941
    %943 = vrot.lane.b32.xlu0 %v700, 17
    %v944 = vpop.permute.xlu0 %943
    %945 = vrot.lane.b32.xlu0 %v701, 17
    %v946 = vpop.permute.xlu0 %945
    %947 = vrot.lane.b32.xlu0 %v696, 17
    %v948 = vpop.permute.xlu0 %947
    %949 = vrot.lane.b32.xlu0 %v734, 17
    %v950 = vpop.permute.xlu0 %949
    %951 = vrot.lane.b32.xlu0 %v735, 17
    %v952 = vpop.permute.xlu0 %951
    %953 = vrot.lane.b32.xlu0 %v736, 17
    %v954 = vpop.permute.xlu0 %953
    %955 = vrot.lane.b32.xlu0 %v737, 17
    %v956 = vpop.permute.xlu0 %955
    %957 = vrot.lane.b32.xlu0 %v732, 17
    %v958 = vpop.permute.xlu0 %957
    %959 = vrot.lane.b32.xlu0 %v755, 17
    %v960 = vpop.permute.xlu0 %959
    %961 = vrot.lane.b32.xlu0 %v763, 17
    %v962 = vpop.permute.xlu0 %961
    %963 = vrot.lane.b32.xlu0 %v764, 17
    %v964 = vpop.permute.xlu0 %963
    %965 = vrot.lane.b32.xlu0 %v765, 17
    %v966 = vpop.permute.xlu0 %965
    %967 = vrot.lane.b32.xlu0 %v761, 17
    %v968 = vpop.permute.xlu0 %967
    %969 = vrot.lane.b32.xlu0 %v788, 17
    %v970 = vpop.permute.xlu0 %969
    %971 = vrot.lane.b32.xlu0 %v798, 17
    %v972 = vpop.permute.xlu0 %971
    %973 = vrot.lane.b32.xlu0 %v799, 17
    %v974 = vpop.permute.xlu0 %973
    %975 = vrot.lane.b32.xlu0 %v800, 17
    %v976 = vpop.permute.xlu0 %975
    %977 = vrot.lane.b32.xlu0 %v801, 17
    %v978 = vpop.permute.xlu0 %977
    %979 = vrot.lane.b32.xlu0 %v824, 17
    %v980 = vpop.permute.xlu0 %979
    %981 = vrot.lane.b32.xlu0 %v834, 17
    %v982 = vpop.permute.xlu0 %981
    %983 = vrot.lane.b32.xlu0 %v835, 17
    %v984 = vpop.permute.xlu0 %983
    %985 = vrot.lane.b32.xlu0 %v836, 17
    %v986 = vpop.permute.xlu0 %985
    %987 = vrot.lane.b32.xlu0 %v837, 17
    %v988 = vpop.permute.xlu0 %987
    %989 = vrot.lane.b32.xlu0 %v860, 17
    %v990 = vpop.permute.xlu0 %989
    %991 = vrot.lane.b32.xlu0 %v870, 17
    %v992 = vpop.permute.xlu0 %991
    %993 = vrot.lane.b32.xlu0 %v871, 17
    %v994 = vpop.permute.xlu0 %993
    %995 = vrot.lane.b32.xlu0 %v872, 17
    %v996 = vpop.permute.xlu0 %995
    %997 = vrot.lane.b32.xlu0 %v873, 17
    %v998 = vpop.permute.xlu0 %997
    %999 = vrot.lane.b32.xlu0 %v896, 17
    %v1000 = vpop.permute.xlu0 %999
    %1001 = vrot.lane.b32.xlu0 %v906, 17
    %v1002 = vpop.permute.xlu0 %1001
    %1003 = vrot.lane.b32.xlu0 %v907, 17
    %v1004 = vpop.permute.xlu0 %1003
    %1005 = vrot.lane.b32.xlu0 %v908, 17
    %v1006 = vpop.permute.xlu0 %1005
    %1007 = vrot.lane.b32.xlu0 %v909, 17
    %v1008 = vpop.permute.xlu0 %1007
    %vm1009 = vcmask 138240
    %v1010 = vsel %vm1009, %v920, %v922
    %v1011 = vsel %vm1009, %v922, %v924
    %v1012 = vsel %vm1009, %v924, %v926
    %v1013 = vsel %vm1009, %v926, %v928
    %v1014 = vsel %vm1009, %v930, %v932
    %v1015 = vsel %vm1009, %v932, %v934
    %v1016 = vsel %vm1009, %v934, %v936
    %v1017 = vsel %vm1009, %v936, %v938
    %v1018 = vsel %vm1009, %v940, %v942
    %v1019 = vsel %vm1009, %v942, %v944
    %v1020 = vsel %vm1009, %v944, %v946
    %v1021 = vsel %vm1009, %v946, %v948
    %v1022 = vsel %vm1009, %v950, %v952
    %v1023 = vsel %vm1009, %v952, %v954
    %v1024 = vsel %vm1009, %v954, %v956
    %v1025 = vsel %vm1009, %v956, %v958
    %v1026 = vsel %vm1009, %v960, %v962
    %v1027 = vsel %vm1009, %v962, %v964
    %v1028 = vsel %vm1009, %v964, %v966
    %v1029 = vsel %vm1009, %v966, %v968
    %v1030 = vsel %vm1009, %v970, %v972
    %v1031 = vsel %vm1009, %v972, %v974
    %v1032 = vsel %vm1009, %v974, %v976
    %v1033 = vsel %vm1009, %v976, %v978
    %v1034 = vsel %vm1009, %v980, %v982
    %v1035 = vsel %vm1009, %v982, %v984
    %v1036 = vsel %vm1009, %v984, %v986
    %v1037 = vsel %vm1009, %v986, %v988
    %v1038 = vsel %vm1009, %v990, %v992
    %v1039 = vsel %vm1009, %v992, %v994
    %v1040 = vsel %vm1009, %v994, %v996
    %v1041 = vsel %vm1009, %v996, %v998
    %v1042 = vsel %vm1009, %v1000, %v1002
    %v1043 = vsel %vm1009, %v1002, %v1004
    %v1044 = vsel %vm1009, %v1004, %v1006
    %v1045 = vsel %vm1009, %v1006, %v1008
    %v1083 = vsel %vm515, %v917, 0
    %1085 = vmatpush.bf16.msra.mxu0 %v1038
    %1086 = vmatpush.bf16.msra.mxu0 %v1034
    %1087 = vmatpush.bf16.msra.mxu0 %v1030
    %1088 = vmatpush.bf16.msra.mxu0 %v1026
    %1089 = vmatpush.bf16.msra.mxu0 %v1022
    %1090 = vmatpush.bf16.msra.mxu0 %v1018
    %1091 = vmatpush.bf16.msra.mxu0 %v1014
    %1092 = vmatpush.bf16.msra.mxu0 %v1010
    %1093 = vmatmul.bf16.gmra.mxu0 %v916
    %v1094 = vpop.f32.mrf.mxu0
    %v1095 = vadd.f32 0.0, %v1094
    %v1096 = vpop.f32.mrf.mxu0
    %v1097 = vadd.f32 0.0, %v1096
    %1098 = vdwg.mxu0
    %1099 = vmatpush.bf16.msra.mxu0 0
    %1100 = vmatpush.bf16.msra.mxu0 0
    %1101 = vmatpush.bf16.msra.mxu0 0
    %1102 = vmatpush.bf16.msra.mxu0 0
    %1103 = vmatpush.bf16.msra.mxu0 0
    %1104 = vmatpush.bf16.msra.mxu0 0
    %1105 = vmatpush.bf16.msra.mxu0 0
    %1106 = vmatpush.bf16.msra.mxu0 %v1042
    %1107 = vmatmul.bf16.gmra.mxu0 %v1083
    %v1108 = vpop.f32.mrf.mxu0
    %v1109 = vadd.f32 %v1095, %v1108
    %v1110 = vpop.f32.mrf.mxu0
    %v1111 = vadd.f32 %v1097, %v1110
    %1112 = vdwg.mxu0
    %1113 = vmatpush.bf16.msra.mxu0 %v1039
    %1114 = vmatpush.bf16.msra.mxu0 %v1035
    %1115 = vmatpush.bf16.msra.mxu0 %v1031
    %1116 = vmatpush.bf16.msra.mxu0 %v1027
    %1117 = vmatpush.bf16.msra.mxu0 %v1023
    %1118 = vmatpush.bf16.msra.mxu0 %v1019
    %1119 = vmatpush.bf16.msra.mxu0 %v1015
    %1120 = vmatpush.bf16.msra.mxu0 %v1011
    %1121 = vmatmul.bf16.gmra.mxu0 %v916
    %v1122 = vpop.f32.mrf.mxu0
    %v1123 = vadd.f32 0.0, %v1122
    %v1124 = vpop.f32.mrf.mxu0
    %v1125 = vadd.f32 0.0, %v1124
    %1126 = vdwg.mxu0
    %1127 = vmatpush.bf16.msra.mxu0 0
    %1128 = vmatpush.bf16.msra.mxu0 0
    %1129 = vmatpush.bf16.msra.mxu0 0
    %1130 = vmatpush.bf16.msra.mxu0 0
    %1131 = vmatpush.bf16.msra.mxu0 0
    %1132 = vmatpush.bf16.msra.mxu0 0
    %1133 = vmatpush.bf16.msra.mxu0 0
    %1134 = vmatpush.bf16.msra.mxu0 %v1043
    %1135 = vmatmul.bf16.gmra.mxu0 %v1083
    %v1136 = vpop.f32.mrf.mxu0
    %v1137 = vadd.f32 %v1123, %v1136
    %v1138 = vpop.f32.mrf.mxu0
    %v1139 = vadd.f32 %v1125, %v1138
    %1140 = vdwg.mxu0
    %1141 = vmatpush.bf16.msra.mxu0 %v1040
    %1142 = vmatpush.bf16.msra.mxu0 %v1036
    %1143 = vmatpush.bf16.msra.mxu0 %v1032
    %1144 = vmatpush.bf16.msra.mxu0 %v1028
    %1145 = vmatpush.bf16.msra.mxu0 %v1024
    %1146 = vmatpush.bf16.msra.mxu0 %v1020
    %1147 = vmatpush.bf16.msra.mxu0 %v1016
    %1148 = vmatpush.bf16.msra.mxu0 %v1012
    %1149 = vmatmul.bf16.gmra.mxu0 %v916
    %v1150 = vpop.f32.mrf.mxu0
    %v1151 = vadd.f32 0.0, %v1150
    %v1152 = vpop.f32.mrf.mxu0
    %v1153 = vadd.f32 0.0, %v1152
    %1154 = vdwg.mxu0
    %1155 = vmatpush.bf16.msra.mxu0 0
    %1156 = vmatpush.bf16.msra.mxu0 0
    %1157 = vmatpush.bf16.msra.mxu0 0
    %1158 = vmatpush.bf16.msra.mxu0 0
    %1159 = vmatpush.bf16.msra.mxu0 0
    %1160 = vmatpush.bf16.msra.mxu0 0
    %1161 = vmatpush.bf16.msra.mxu0 0
    %1162 = vmatpush.bf16.msra.mxu0 %v1044
    %1163 = vmatmul.bf16.gmra.mxu0 %v1083
    %v1164 = vpop.f32.mrf.mxu0
    %v1165 = vadd.f32 %v1151, %v1164
    %v1166 = vpop.f32.mrf.mxu0
    %v1167 = vadd.f32 %v1153, %v1166
    %1168 = vdwg.mxu0
    %1169 = vmatpush.bf16.msra.mxu0 %v1041
    %1170 = vmatpush.bf16.msra.mxu0 %v1037
    %1171 = vmatpush.bf16.msra.mxu0 %v1033
    %1172 = vmatpush.bf16.msra.mxu0 %v1029
    %1173 = vmatpush.bf16.msra.mxu0 %v1025
    %1174 = vmatpush.bf16.msra.mxu0 %v1021
    %1175 = vmatpush.bf16.msra.mxu0 %v1017
    %1176 = vmatpush.bf16.msra.mxu0 %v1013
    %1177 = vmatmul.bf16.gmra.mxu0 %v916
    %v1178 = vpop.f32.mrf.mxu0
    %v1179 = vadd.f32 0.0, %v1178
    %v1180 = vpop.f32.mrf.mxu0
    %v1181 = vadd.f32 0.0, %v1180
    %1182 = vdwg.mxu0
    %1183 = vmatpush.bf16.msra.mxu0 0
    %1184 = vmatpush.bf16.msra.mxu0 0
    %1185 = vmatpush.bf16.msra.mxu0 0
    %1186 = vmatpush.bf16.msra.mxu0 0
    %1187 = vmatpush.bf16.msra.mxu0 0
    %1188 = vmatpush.bf16.msra.mxu0 0
    %1189 = vmatpush.bf16.msra.mxu0 0
    %1190 = vmatpush.bf16.msra.mxu0 %v1045
    %1191 = vmatmul.bf16.gmra.mxu0 %v1083
    %v1192 = vpop.f32.mrf.mxu0
    %v1193 = vadd.f32 %v1179, %v1192
    %v1194 = vpop.f32.mrf.mxu0
    %v1195 = vadd.f32 %v1181, %v1194
    %1196 = vdwg.mxu0
    %v1197 = vadd.f32 %v1109, %v1137
    %v1198 = vadd.f32 %v1197, %v1165
    %v1199 = vadd.f32 %v1198, %v1193
    %1200 = vadd.xlane.f32.xlu0 %v1199
    %v1201 = vpop.xlane.xlu0 %1200
    %v1202 = vadd.f32 %v1111, %v1139
    %v1203 = vadd.f32 %v1202, %v1167
    %v1204 = vadd.f32 %v1203, %v1195
    %1205 = vadd.xlane.f32.xlu0 %v1204
    %v1206 = vpop.xlane.xlu0 %1205
    %v1207 = vadd.f32 %v1201, 0.0
    %v1208 = vadd.f32 %v1206, 0.0
    %v1209 = vmul.f32 %v1109, %v1109
    %v1210 = vmul.f32 %v1137, %v1137
    %v1211 = vmul.f32 %v1165, %v1165
    %v1212 = vmul.f32 %v1193, %v1193
    %v1213 = vmul.f32 %v1111, %v1111
    %v1214 = vmul.f32 %v1139, %v1139
    %v1215 = vmul.f32 %v1167, %v1167
    %v1216 = vmul.f32 %v1195, %v1195
    %v1217 = vadd.f32 %v1209, %v1210
    %v1218 = vadd.f32 %v1217, %v1211
    %v1219 = vadd.f32 %v1218, %v1212
    %1220 = vadd.xlane.f32.xlu0 %v1219
    %v1221 = vpop.xlane.xlu0 %1220
    %v1222 = vadd.f32 %v1213, %v1214
    %v1223 = vadd.f32 %v1222, %v1215
    %v1224 = vadd.f32 %v1223, %v1216
    %1225 = vadd.xlane.f32.xlu0 %v1224
    %v1226 = vpop.xlane.xlu0 %1225
    %v1227 = vadd.f32 %v1221, 0.0
    %v1228 = vadd.f32 %v1226, 0.0
    %v1229 = vmul.f32 %v1207, 0.001953125
    %v1230 = vmul.f32 %v1208, 0.001953125
    %v1231 = vmul.f32 %v1227, 0.001953125
    %v1232 = vmul.f32 %v1228, 0.001953125
    %v1233 = vmul.f32 %v1229, %v1229
    %v1234 = vmul.f32 %v1230, %v1230
    %v1235 = vsub.f32 %v1231, %v1233
    %v1236 = vsub.f32 %v1232, %v1234
    %v1237 = vmax.f32 %v1235, 0.0
    %v1238 = vmax.f32 %v1236, 0.0
    %v1239 = vld [vmem:[%s3] sm:$0xff]
    %v1240 = vld [vmem:[%s3 + $0x8] sm:$0xff]
    %v1241 = vadd.f32 %v1237, 1e-05
    %v1242 = vadd.f32 %v1238, 1e-05
    %v1243 = vrsqrt.pop %v1241
    %v1244 = vmul.f32 %v1243, %v1241
    %v1245 = vmul.f32 %v1244, %v1243
    %v1246 = vmul.f32 0.5, %v1245
    %v1247 = vsub.f32 1.5, %v1246
    %v1248 = vmul.f32 %v1243, %v1247
    %vm1249 = vweird.f32 %v1241
    %vm1250 = vweird.f32 %v1243
    %vm1251 = vmor %vm1249, %vm1250
    %v1252 = vsel %vm1251, %v1243, %v1248
    %v1253 = vrsqrt.pop %v1242
    %v1254 = vmul.f32 %v1253, %v1242
    %v1255 = vmul.f32 %v1254, %v1253
    %v1256 = vmul.f32 0.5, %v1255
    %v1257 = vsub.f32 1.5, %v1256
    %v1258 = vmul.f32 %v1253, %v1257
    %vm1259 = vweird.f32 %v1242
    %vm1260 = vweird.f32 %v1253
    %vm1261 = vmor %vm1259, %vm1260
    %v1262 = vsel %vm1261, %v1253, %v1258
    %v1263 = vmul.f32 %v1239, %v1252
    %v1264 = vmul.f32 %v1240, %v1262
    %v1265 = vld [vmem:[%s4] sm:$0xff]
    %v1266 = vld [vmem:[%s4 + $0x8] sm:$0xff]
    %v1267 = vmul.f32 %v1229, %v1263
    %v1268 = vmul.f32 %v1230, %v1264
    %v1269 = vsub.f32 %v1265, %v1267
    %v1270 = vsub.f32 %v1266, %v1268
    %1272 = vset.pattern.permute.xlu0 0
    %1273 = vperm.xlu0 %1272, %v1263
    %v1274 = vpop.permute.xlu0 %1273
    %1277 = vset.pattern.permute.xlu0 0
    %1278 = vperm.xlu0 %1277, %v1264
    %v1279 = vpop.permute.xlu0 %1278
    %v1281 = vmul.f32 %v1109, %v1274
    %v1282 = vmul.f32 %v1137, %v1274
    %v1283 = vmul.f32 %v1165, %v1274
    %v1284 = vmul.f32 %v1193, %v1274
    %v1285 = vmul.f32 %v1111, %v1279
    %v1286 = vmul.f32 %v1139, %v1279
    %v1287 = vmul.f32 %v1167, %v1279
    %v1288 = vmul.f32 %v1195, %v1279
    %1290 = vset.pattern.permute.xlu0 0
    %1291 = vperm.xlu0 %1290, %v1269
    %v1292 = vpop.permute.xlu0 %1291
    %1295 = vset.pattern.permute.xlu0 0
    %1296 = vperm.xlu0 %1295, %v1270
    %v1297 = vpop.permute.xlu0 %1296
    %v1299 = vadd.f32 %v1281, %v1292
    %v1300 = vadd.f32 %v1282, %v1292
    %v1301 = vadd.f32 %v1283, %v1292
    %v1302 = vadd.f32 %v1284, %v1292
    %v1303 = vadd.f32 %v1285, %v1297
    %v1304 = vadd.f32 %v1286, %v1297
    %v1305 = vadd.f32 %v1287, %v1297
    %v1306 = vadd.f32 %v1288, %v1297
    %v1307 = vmax.f32 %v1299, 0.0
    %v1308 = vmax.f32 %v1300, 0.0
    %v1309 = vmax.f32 %v1301, 0.0
    %v1310 = vmax.f32 %v1302, 0.0
    %v1311 = vmax.f32 %v1303, 0.0
    %v1312 = vmax.f32 %v1304, 0.0
    %v1313 = vmax.f32 %v1305, 0.0
    %v1314 = vmax.f32 %v1306, 0.0
    %v1315 = vpack.c.bf16 %v1308, %v1307
    %v1316 = vpack.c.bf16 %v1310, %v1309
    %v1317 = vpack.c.bf16 %v1312, %v1311
    %v1318 = vpack.c.bf16 %v1314, %v1313
    %1319 = vst [vmem:[#allocation2 + $0x4] sm:$0xff] %v1315
    %1320 = vst [vmem:[#allocation2 + $0xc] sm:$0xff] %v1316
    %1321 = vst [vmem:[#allocation2 + $0x1c] sm:$0xff] %v1317
    %1322 = vst [vmem:[#allocation2 + $0x24] sm:$0xff] %v1318
    %v1323 = vld [vmem:[%s5] sm:$0xff]
    %v1324 = vld [vmem:[%s5 + $0x8] sm:$0xff]
    %v1325 = vld [vmem:[#allocation2] sm:$0xff]
    %v1326 = vld [vmem:[#allocation2 + $0x8] sm:$0xff]
    %v1327 = vld [vmem:[#allocation2 + $0x10] sm:$0xf]
    %v1328 = vld [vmem:[#allocation2 + $0x18] sm:$0xff]
    %v1329 = vld [vmem:[#allocation2 + $0x20] sm:$0xff]
    %v1330 = vld [vmem:[#allocation2 + $0x28] sm:$0xf]
    %v1331 = vld [vmem:[%s1] sm:$0x11]
    %v1332 = vld [vmem:[%s1 + $0x8] sm:$0x11]
    %v1335 = vunpack.c.l.b16 %v1331
    %v1336 = vunpack.c.h.b16 %v1331
    %v1337 = vunpack.c.l.b16 %v1332
    %v1338 = vunpack.c.h.b16 %v1332
    %v1339 = vpack.c.b16 %v1335, %v1335
    %v1340 = vpack.c.b16 %v1336, %v1336
    %v1341 = vpack.c.b16 %v1337, %v1337
    %v1342 = vpack.c.b16 %v1338, %v1338
    %v1344 = vpack.i.b16 %v1339, %v1339
    %v1346 = vperm.slane %v1344, 0
    %v1348 = vpack.i.b16 %v1340, %v1340
    %v1350 = vperm.slane %v1348, 0
    %v1352 = vpack.i.b16 %v1341, %v1341
    %v1354 = vperm.slane %v1352, 0
    %v1356 = vpack.i.b16 %v1342, %v1342
    %v1358 = vperm.slane %v1356, 0
    %v1359 = vunpack.c.l.bf16 %v1325
    %v1360 = vunpack.c.h.bf16 %v1325
    %v1361 = vunpack.c.l.bf16 %v1326
    %v1362 = vunpack.c.h.bf16 %v1326
    %v1363 = vunpack.c.l.bf16 %v1327
    %v1364 = vunpack.c.l.bf16 %v1328
    %v1365 = vunpack.c.h.bf16 %v1328
    %v1366 = vunpack.c.l.bf16 %v1329
    %v1367 = vunpack.c.h.bf16 %v1329
    %v1368 = vunpack.c.l.bf16 %v1330
    %v1369 = vunpack.c.l.bf16 %v1346
    %v1370 = vunpack.c.l.bf16 %v1350
    %v1371 = vunpack.c.l.bf16 %v1354
    %v1372 = vunpack.c.l.bf16 %v1358
    %1377 = vrot.lane.b32.xlu0 %v1369, 111
    %v1378 = vpop.permute.xlu0 %1377
    %1379 = vrot.lane.b32.xlu0 %v1370, 111
    %v1380 = vpop.permute.xlu0 %1379
    %1381 = vrot.lane.b32.xlu0 %v1371, 111
    %v1382 = vpop.permute.xlu0 %1381
    %1383 = vrot.lane.b32.xlu0 %v1372, 111
    %v1384 = vpop.permute.xlu0 %1383
    %v1385 = vsel %vm113, %v1378, %v1380
    %v1386 = vsel %vm113, %v1380, %v1382
    %v1387 = vsel %vm113, %v1382, %v1384
    %v1393 = vmul.f32 %v1359, %v1378
    %v1394 = vmul.f32 %v1360, %v1385
    %v1395 = vmul.f32 %v1361, %v1386
    %v1396 = vmul.f32 %v1362, %v1387
    %v1397 = vmul.f32 %v1363, %v1384
    %v1398 = vmul.f32 %v1364, %v1378
    %v1399 = vmul.f32 %v1365, %v1385
    %v1400 = vmul.f32 %v1366, %v1386
    %v1401 = vmul.f32 %v1367, %v1387
    %v1402 = vmul.f32 %v1368, %v1384
    %v1403 = vpack.c.bf16 %v1394, %v1393
    %v1404 = vpack.c.bf16 %v1396, %v1395
    %v1405 = vpack.c.bf16 %v1397, %v1397
    %v1406 = vpack.c.bf16 %v1399, %v1398
    %v1407 = vpack.c.bf16 %v1401, %v1400
    %v1408 = vpack.c.bf16 %v1402, %v1402
    %v1409 = vshrl.u32 %v1339, 16
    %v1410 = vpack.i.b16 %v1409, %v1409
    %v1412 = vperm.slane %v1410, 0
    %v1413 = vshrl.u32 %v1340, 16
    %v1414 = vpack.i.b16 %v1413, %v1413
    %v1416 = vperm.slane %v1414, 0
    %v1417 = vshrl.u32 %v1341, 16
    %v1418 = vpack.i.b16 %v1417, %v1417
    %v1420 = vperm.slane %v1418, 0
    %v1421 = vshrl.u32 %v1342, 16
    %v1422 = vpack.i.b16 %v1421, %v1421
    %v1424 = vperm.slane %v1422, 0
    %v1425 = vunpack.c.l.bf16 %v1412
    %v1426 = vunpack.c.l.bf16 %v1416
    %v1427 = vunpack.c.l.bf16 %v1420
    %v1428 = vunpack.c.l.bf16 %v1424
    %1433 = vrot.lane.b32.xlu0 %v1425, 112
    %v1434 = vpop.permute.xlu0 %1433
    %1435 = vrot.lane.b32.xlu0 %v1426, 112
    %v1436 = vpop.permute.xlu0 %1435
    %1437 = vrot.lane.b32.xlu0 %v1427, 112
    %v1438 = vpop.permute.xlu0 %1437
    %1439 = vrot.lane.b32.xlu0 %v1428, 112
    %v1440 = vpop.permute.xlu0 %1439
    %v1441 = vsel %vm170, %v1434, %v1436
    %v1442 = vsel %vm170, %v1436, %v1438
    %v1443 = vsel %vm170, %v1438, %v1440
    %v1449 = vmul.f32 %v1359, %v1434
    %v1450 = vmul.f32 %v1360, %v1441
    %v1451 = vmul.f32 %v1361, %v1442
    %v1452 = vmul.f32 %v1362, %v1443
    %v1453 = vmul.f32 %v1363, %v1440
    %v1454 = vmul.f32 %v1364, %v1434
    %v1455 = vmul.f32 %v1365, %v1441
    %v1456 = vmul.f32 %v1366, %v1442
    %v1457 = vmul.f32 %v1367, %v1443
    %v1458 = vmul.f32 %v1368, %v1440
    %v1459 = vpack.c.bf16 %v1450, %v1449
    %v1460 = vpack.c.bf16 %v1452, %v1451
    %v1461 = vpack.c.bf16 %v1453, %v1453
    %v1462 = vpack.c.bf16 %v1455, %v1454
    %v1463 = vpack.c.bf16 %v1457, %v1456
    %v1464 = vpack.c.bf16 %v1458, %v1458
    %v1465 = vld [vmem:[%s1] sm:$0x22]
    %v1466 = vld [vmem:[%s1 + $0x8] sm:$0x22]
    %v1469 = vunpack.c.l.b16 %v1465
    %v1470 = vunpack.c.h.b16 %v1465
    %v1471 = vunpack.c.l.b16 %v1466
    %v1472 = vunpack.c.h.b16 %v1466
    %v1473 = vpack.c.b16 %v1469, %v1469
    %v1474 = vpack.c.b16 %v1470, %v1470
    %v1475 = vpack.c.b16 %v1471, %v1471
    %v1476 = vpack.c.b16 %v1472, %v1472
    %v1478 = vpack.i.b16 %v1473, %v1473
    %v1480 = vperm.slane %v1478, 1
    %v1482 = vpack.i.b16 %v1474, %v1474
    %v1484 = vperm.slane %v1482, 1
    %v1486 = vpack.i.b16 %v1475, %v1475
    %v1488 = vperm.slane %v1486, 1
    %v1490 = vpack.i.b16 %v1476, %v1476
    %v1492 = vperm.slane %v1490, 1
    %v1493 = vunpack.c.l.bf16 %v1480
    %v1494 = vunpack.c.l.bf16 %v1484
    %v1495 = vunpack.c.l.bf16 %v1488
    %v1496 = vunpack.c.l.bf16 %v1492
    %1501 = vrot.lane.b32.xlu0 %v1493, 113
    %v1502 = vpop.permute.xlu0 %1501
    %1503 = vrot.lane.b32.xlu0 %v1494, 113
    %v1504 = vpop.permute.xlu0 %1503
    %1505 = vrot.lane.b32.xlu0 %v1495, 113
    %v1506 = vpop.permute.xlu0 %1505
    %1507 = vrot.lane.b32.xlu0 %v1496, 113
    %v1508 = vpop.permute.xlu0 %1507
    %v1509 = vsel %vm239, %v1502, %v1504
    %v1510 = vsel %vm239, %v1504, %v1506
    %v1511 = vsel %vm239, %v1506, %v1508
    %v1517 = vmul.f32 %v1359, %v1502
    %v1518 = vmul.f32 %v1360, %v1509
    %v1519 = vmul.f32 %v1361, %v1510
    %v1520 = vmul.f32 %v1362, %v1511
    %v1521 = vmul.f32 %v1363, %v1508
    %v1522 = vmul.f32 %v1364, %v1502
    %v1523 = vmul.f32 %v1365, %v1509
    %v1524 = vmul.f32 %v1366, %v1510
    %v1525 = vmul.f32 %v1367, %v1511
    %v1526 = vmul.f32 %v1368, %v1508
    %v1527 = vpack.c.bf16 %v1518, %v1517
    %v1528 = vpack.c.bf16 %v1520, %v1519
    %v1529 = vpack.c.bf16 %v1521, %v1521
    %v1530 = vpack.c.bf16 %v1523, %v1522
    %v1531 = vpack.c.bf16 %v1525, %v1524
    %v1532 = vpack.c.bf16 %v1526, %v1526
    %v1533 = vshrl.u32 %v1473, 16
    %v1534 = vpack.i.b16 %v1533, %v1533
    %v1536 = vperm.slane %v1534, 1
    %v1537 = vshrl.u32 %v1474, 16
    %v1538 = vpack.i.b16 %v1537, %v1537
    %v1540 = vperm.slane %v1538, 1
    %v1541 = vshrl.u32 %v1475, 16
    %v1542 = vpack.i.b16 %v1541, %v1541
    %v1544 = vperm.slane %v1542, 1
    %v1545 = vshrl.u32 %v1476, 16
    %v1546 = vpack.i.b16 %v1545, %v1545
    %v1548 = vperm.slane %v1546, 1
    %v1549 = vunpack.c.l.bf16 %v1536
    %v1550 = vunpack.c.l.bf16 %v1540
    %v1551 = vunpack.c.l.bf16 %v1544
    %v1552 = vunpack.c.l.bf16 %v1548
    %1557 = vrot.lane.b32.xlu0 %v1549, 127
    %v1558 = vpop.permute.xlu0 %1557
    %1559 = vrot.lane.b32.xlu0 %v1550, 127
    %v1560 = vpop.permute.xlu0 %1559
    %1561 = vrot.lane.b32.xlu0 %v1551, 127
    %v1562 = vpop.permute.xlu0 %1561
    %1563 = vrot.lane.b32.xlu0 %v1552, 127
    %v1564 = vpop.permute.xlu0 %1563
    %v1565 = vsel %vm296, %v1558, %v1560
    %v1566 = vsel %vm296, %v1560, %v1562
    %v1567 = vsel %vm296, %v1562, %v1564
    %v1573 = vmul.f32 %v1359, %v1558
    %v1574 = vmul.f32 %v1360, %v1565
    %v1575 = vmul.f32 %v1361, %v1566
    %v1576 = vmul.f32 %v1362, %v1567
    %v1577 = vmul.f32 %v1363, %v1564
    %v1578 = vmul.f32 %v1364, %v1558
    %v1579 = vmul.f32 %v1365, %v1565
    %v1580 = vmul.f32 %v1366, %v1566
    %v1581 = vmul.f32 %v1367, %v1567
    %v1582 = vmul.f32 %v1368, %v1564
    %v1583 = vpack.c.bf16 %v1574, %v1573
    %v1584 = vpack.c.bf16 %v1576, %v1575
    %v1585 = vpack.c.bf16 %v1577, %v1577
    %v1586 = vpack.c.bf16 %v1579, %v1578
    %v1587 = vpack.c.bf16 %v1581, %v1580
    %v1588 = vpack.c.bf16 %v1582, %v1582
    %v1589 = vld [vmem:[#allocation2 + $0x4] sm:$0xff]
    %v1590 = vld [vmem:[#allocation2 + $0xc] sm:$0xff]
    %v1591 = vld [vmem:[#allocation2 + $0x1c] sm:$0xff]
    %v1592 = vld [vmem:[#allocation2 + $0x24] sm:$0xff]
    %v1593 = vld [vmem:[#allocation2 + $0x4] sm:$0xff]
    %v1594 = vld [vmem:[#allocation2 + $0xc] sm:$0xff]
    %v1595 = vld [vmem:[#allocation2 + $0x14] sm:$0xf]
    %v1596 = vld [vmem:[#allocation2 + $0x1c] sm:$0xff]
    %v1597 = vld [vmem:[#allocation2 + $0x24] sm:$0xff]
    %v1598 = vld [vmem:[#allocation2 + $0x2c] sm:$0xf]
    %v1599 = vld [vmem:[%s1] sm:$0x44]
    %v1600 = vld [vmem:[%s1 + $0x8] sm:$0x44]
    %v1603 = vunpack.c.l.b16 %v1599
    %v1604 = vunpack.c.h.b16 %v1599
    %v1605 = vunpack.c.l.b16 %v1600
    %v1606 = vunpack.c.h.b16 %v1600
    %v1607 = vpack.c.b16 %v1603, %v1603
    %v1608 = vpack.c.b16 %v1604, %v1604
    %v1609 = vpack.c.b16 %v1605, %v1605
    %v1610 = vpack.c.b16 %v1606, %v1606
    %v1612 = vshrl.u32 %v1607, 16
    %v1613 = vpack.i.b16 %v1612, %v1612
    %v1615 = vperm.slane %v1613, 2
    %v1617 = vshrl.u32 %v1608, 16
    %v1618 = vpack.i.b16 %v1617, %v1617
    %v1620 = vperm.slane %v1618, 2
    %v1622 = vshrl.u32 %v1609, 16
    %v1623 = vpack.i.b16 %v1622, %v1622
    %v1625 = vperm.slane %v1623, 2
    %v1627 = vshrl.u32 %v1610, 16
    %v1628 = vpack.i.b16 %v1627, %v1627
    %v1630 = vperm.slane %v1628, 2
    %v1631 = vunpack.c.l.bf16 %v1593
    %v1632 = vunpack.c.h.bf16 %v1593
    %v1633 = vunpack.c.l.bf16 %v1594
    %v1634 = vunpack.c.h.bf16 %v1594
    %v1635 = vunpack.c.l.bf16 %v1595
    %v1636 = vunpack.c.l.bf16 %v1596
    %v1637 = vunpack.c.h.bf16 %v1596
    %v1638 = vunpack.c.l.bf16 %v1597
    %v1639 = vunpack.c.h.bf16 %v1597
    %v1640 = vunpack.c.l.bf16 %v1598
    %v1641 = vunpack.c.l.bf16 %v1615
    %v1642 = vunpack.c.l.bf16 %v1620
    %v1643 = vunpack.c.l.bf16 %v1625
    %v1644 = vunpack.c.l.bf16 %v1630
    %1649 = vrot.lane.b32.xlu0 %v1641, 1
    %v1650 = vpop.permute.xlu0 %1649
    %1651 = vrot.lane.b32.xlu0 %v1642, 1
    %v1652 = vpop.permute.xlu0 %1651
    %1653 = vrot.lane.b32.xlu0 %v1643, 1
    %v1654 = vpop.permute.xlu0 %1653
    %1655 = vrot.lane.b32.xlu0 %v1644, 1
    %v1656 = vpop.permute.xlu0 %1655
    %v1657 = vsel %vm389, %v1650, %v1652
    %v1658 = vsel %vm389, %v1652, %v1654
    %v1659 = vsel %vm389, %v1654, %v1656
    %v1665 = vmul.f32 %v1631, %v1650
    %v1666 = vmul.f32 %v1632, %v1657
    %v1667 = vmul.f32 %v1633, %v1658
    %v1668 = vmul.f32 %v1634, %v1659
    %v1669 = vmul.f32 %v1635, %v1656
    %v1670 = vmul.f32 %v1636, %v1650
    %v1671 = vmul.f32 %v1637, %v1657
    %v1672 = vmul.f32 %v1638, %v1658
    %v1673 = vmul.f32 %v1639, %v1659
    %v1674 = vmul.f32 %v1640, %v1656
    %v1675 = vpack.c.bf16 %v1666, %v1665
    %v1676 = vpack.c.bf16 %v1668, %v1667
    %v1677 = vpack.c.bf16 %v1669, %v1669
    %v1678 = vpack.c.bf16 %v1671, %v1670
    %v1679 = vpack.c.bf16 %v1673, %v1672
    %v1680 = vpack.c.bf16 %v1674, %v1674
    %v1681 = vld [vmem:[%s1] sm:$0x88]
    %v1682 = vld [vmem:[%s1 + $0x8] sm:$0x88]
    %v1685 = vunpack.c.l.b16 %v1681
    %v1686 = vunpack.c.h.b16 %v1681
    %v1687 = vunpack.c.l.b16 %v1682
    %v1688 = vunpack.c.h.b16 %v1682
    %v1689 = vpack.c.b16 %v1685, %v1685
    %v1690 = vpack.c.b16 %v1686, %v1686
    %v1691 = vpack.c.b16 %v1687, %v1687
    %v1692 = vpack.c.b16 %v1688, %v1688
    %v1694 = vpack.i.b16 %v1689, %v1689
    %v1696 = vperm.slane %v1694, 3
    %v1698 = vpack.i.b16 %v1690, %v1690
    %v1700 = vperm.slane %v1698, 3
    %v1702 = vpack.i.b16 %v1691, %v1691
    %v1704 = vperm.slane %v1702, 3
    %v1706 = vpack.i.b16 %v1692, %v1692
    %v1708 = vperm.slane %v1706, 3
    %v1709 = vunpack.c.l.bf16 %v1696
    %v1710 = vunpack.c.l.bf16 %v1700
    %v1711 = vunpack.c.l.bf16 %v1704
    %v1712 = vunpack.c.l.bf16 %v1708
    %1717 = vrot.lane.b32.xlu0 %v1709, 15
    %v1718 = vpop.permute.xlu0 %1717
    %1719 = vrot.lane.b32.xlu0 %v1710, 15
    %v1720 = vpop.permute.xlu0 %1719
    %1721 = vrot.lane.b32.xlu0 %v1711, 15
    %v1722 = vpop.permute.xlu0 %1721
    %1723 = vrot.lane.b32.xlu0 %v1712, 15
    %v1724 = vpop.permute.xlu0 %1723
    %v1725 = vsel %vm458, %v1718, %v1720
    %v1726 = vsel %vm458, %v1720, %v1722
    %v1727 = vsel %vm458, %v1722, %v1724
    %v1733 = vmul.f32 %v1631, %v1718
    %v1734 = vmul.f32 %v1632, %v1725
    %v1735 = vmul.f32 %v1633, %v1726
    %v1736 = vmul.f32 %v1634, %v1727
    %v1737 = vmul.f32 %v1635, %v1724
    %v1738 = vmul.f32 %v1636, %v1718
    %v1739 = vmul.f32 %v1637, %v1725
    %v1740 = vmul.f32 %v1638, %v1726
    %v1741 = vmul.f32 %v1639, %v1727
    %v1742 = vmul.f32 %v1640, %v1724
    %v1743 = vpack.c.bf16 %v1734, %v1733
    %v1744 = vpack.c.bf16 %v1736, %v1735
    %v1745 = vpack.c.bf16 %v1737, %v1737
    %v1746 = vpack.c.bf16 %v1739, %v1738
    %v1747 = vpack.c.bf16 %v1741, %v1740
    %v1748 = vpack.c.bf16 %v1742, %v1742
    %v1749 = vshrl.u32 %v1689, 16
    %v1750 = vpack.i.b16 %v1749, %v1749
    %v1752 = vperm.slane %v1750, 3
    %v1753 = vshrl.u32 %v1690, 16
    %v1754 = vpack.i.b16 %v1753, %v1753
    %v1756 = vperm.slane %v1754, 3
    %v1757 = vshrl.u32 %v1691, 16
    %v1758 = vpack.i.b16 %v1757, %v1757
    %v1760 = vperm.slane %v1758, 3
    %v1761 = vshrl.u32 %v1692, 16
    %v1762 = vpack.i.b16 %v1761, %v1761
    %v1764 = vperm.slane %v1762, 3
    %v1765 = vunpack.c.l.bf16 %v1752
    %v1766 = vunpack.c.l.bf16 %v1756
    %v1767 = vunpack.c.l.bf16 %v1760
    %v1768 = vunpack.c.l.bf16 %v1764
    %1773 = vrot.lane.b32.xlu0 %v1765, 16
    %v1774 = vpop.permute.xlu0 %1773
    %1775 = vrot.lane.b32.xlu0 %v1766, 16
    %v1776 = vpop.permute.xlu0 %1775
    %1777 = vrot.lane.b32.xlu0 %v1767, 16
    %v1778 = vpop.permute.xlu0 %1777
    %1779 = vrot.lane.b32.xlu0 %v1768, 16
    %v1780 = vpop.permute.xlu0 %1779
    %v1781 = vsel %vm515, %v1774, %v1776
    %v1782 = vsel %vm515, %v1776, %v1778
    %v1783 = vsel %vm515, %v1778, %v1780
    %v1789 = vmul.f32 %v1631, %v1774
    %v1790 = vmul.f32 %v1632, %v1781
    %v1791 = vmul.f32 %v1633, %v1782
    %v1792 = vmul.f32 %v1634, %v1783
    %v1793 = vmul.f32 %v1635, %v1780
    %v1794 = vmul.f32 %v1636, %v1774
    %v1795 = vmul.f32 %v1637, %v1781
    %v1796 = vmul.f32 %v1638, %v1782
    %v1797 = vmul.f32 %v1639, %v1783
    %v1798 = vmul.f32 %v1640, %v1780
    %v1799 = vpack.c.bf16 %v1790, %v1789
    %v1800 = vpack.c.bf16 %v1792, %v1791
    %v1801 = vpack.c.bf16 %v1793, %v1793
    %v1802 = vpack.c.bf16 %v1795, %v1794
    %v1803 = vpack.c.bf16 %v1797, %v1796
    %v1804 = vpack.c.bf16 %v1798, %v1798
    %v1805 = vld [vmem:[%s1 + $0x10] sm:$0x11]
    %v1806 = vld [vmem:[%s1 + $0x18] sm:$0x11]
    %v1809 = vunpack.c.l.b16 %v1805
    %v1810 = vunpack.c.h.b16 %v1805
    %v1811 = vunpack.c.l.b16 %v1806
    %v1812 = vunpack.c.h.b16 %v1806
    %v1813 = vpack.c.b16 %v1809, %v1809
    %v1814 = vpack.c.b16 %v1810, %v1810
    %v1815 = vpack.c.b16 %v1811, %v1811
    %v1816 = vpack.c.b16 %v1812, %v1812
    %v1818 = vpack.i.b16 %v1813, %v1813
    %v1820 = vperm.slane %v1818, 0
    %v1822 = vpack.i.b16 %v1814, %v1814
    %v1824 = vperm.slane %v1822, 0
    %v1826 = vpack.i.b16 %v1815, %v1815
    %v1828 = vperm.slane %v1826, 0
    %v1830 = vpack.i.b16 %v1816, %v1816
    %v1832 = vperm.slane %v1830, 0
    %v1833 = vunpack.c.l.bf16 %v1820
    %v1834 = vunpack.c.l.bf16 %v1824
    %v1835 = vunpack.c.l.bf16 %v1828
    %v1836 = vunpack.c.l.bf16 %v1832
    %1841 = vrot.lane.b32.xlu0 %v1833, 17
    %v1842 = vpop.permute.xlu0 %1841
    %1843 = vrot.lane.b32.xlu0 %v1834, 17
    %v1844 = vpop.permute.xlu0 %1843
    %1845 = vrot.lane.b32.xlu0 %v1835, 17
    %v1846 = vpop.permute.xlu0 %1845
    %1847 = vrot.lane.b32.xlu0 %v1836, 17
    %v1848 = vpop.permute.xlu0 %1847
    %v1849 = vsel %vm584, %v1842, %v1844
    %v1850 = vsel %vm584, %v1844, %v1846
    %v1851 = vsel %vm584, %v1846, %v1848
    %v1857 = vmul.f32 %v1631, %v1842
    %v1858 = vmul.f32 %v1632, %v1849
    %v1859 = vmul.f32 %v1633, %v1850
    %v1860 = vmul.f32 %v1634, %v1851
    %v1861 = vmul.f32 %v1635, %v1848
    %v1862 = vmul.f32 %v1636, %v1842
    %v1863 = vmul.f32 %v1637, %v1849
    %v1864 = vmul.f32 %v1638, %v1850
    %v1865 = vmul.f32 %v1639, %v1851
    %v1866 = vmul.f32 %v1640, %v1848
    %v1867 = vpack.c.bf16 %v1858, %v1857
    %v1868 = vpack.c.bf16 %v1860, %v1859
    %v1869 = vpack.c.bf16 %v1861, %v1861
    %v1870 = vpack.c.bf16 %v1863, %v1862
    %v1871 = vpack.c.bf16 %v1865, %v1864
    %v1872 = vpack.c.bf16 %v1866, %v1866
    %v1879 = vunpack.c.l.b16 %v1403
    %v1880 = vunpack.c.h.b16 %v1403
    %v1881 = vunpack.c.l.b16 %v1404
    %v1882 = vunpack.c.h.b16 %v1404
    %v1883 = vunpack.c.l.b16 %v1405
    %v1884 = vunpack.c.l.b16 %v1406
    %v1885 = vunpack.c.h.b16 %v1406
    %v1886 = vunpack.c.l.b16 %v1407
    %v1887 = vunpack.c.h.b16 %v1407
    %v1888 = vunpack.c.l.b16 %v1408
    %v1889 = vpack.c.b16 %v1884, %v1879
    %v1890 = vpack.c.b16 %v1885, %v1880
    %v1891 = vpack.c.b16 %v1886, %v1881
    %v1892 = vpack.c.b16 %v1887, %v1882
    %v1893 = vpack.c.b16 %v1888, %v1883
    %v1900 = vunpack.c.l.b16 %v1459
    %v1901 = vunpack.c.h.b16 %v1459
    %v1902 = vunpack.c.l.b16 %v1460
    %v1903 = vunpack.c.h.b16 %v1460
    %v1904 = vunpack.c.l.b16 %v1461
    %v1905 = vunpack.c.l.b16 %v1462
    %v1906 = vunpack.c.h.b16 %v1462
    %v1907 = vunpack.c.l.b16 %v1463
    %v1908 = vunpack.c.h.b16 %v1463
    %v1909 = vunpack.c.l.b16 %v1464
    %v1910 = vpack.c.b16 %v1905, %v1900
    %v1911 = vpack.c.b16 %v1906, %v1901
    %v1912 = vpack.c.b16 %v1907, %v1902
    %v1913 = vpack.c.b16 %v1908, %v1903
    %v1914 = vpack.c.b16 %v1909, %v1904
    %1915 = vrot.lane.b32.xlu0 %v1910, 127
    %v1916 = vpop.permute.xlu0 %1915
    %1917 = vrot.lane.b32.xlu0 %v1911, 127
    %v1918 = vpop.permute.xlu0 %1917
    %1919 = vrot.lane.b32.xlu0 %v1912, 127
    %v1920 = vpop.permute.xlu0 %1919
    %1921 = vrot.lane.b32.xlu0 %v1913, 127
    %v1922 = vpop.permute.xlu0 %1921
    %1923 = vrot.lane.b32.xlu0 %v1914, 127
    %v1924 = vpop.permute.xlu0 %1923
    %v1925 = vsel %vm661, %v1916, %v1918
    %v1926 = vsel %vm661, %v1918, %v1920
    %v1927 = vsel %vm661, %v1920, %v1922
    %v1928 = vsel %vm661, %v1922, %v1924
    %v1935 = vunpack.c.l.b16 %v1527
    %v1936 = vunpack.c.h.b16 %v1527
    %v1937 = vunpack.c.l.b16 %v1528
    %v1938 = vunpack.c.h.b16 %v1528
    %v1939 = vunpack.c.l.b16 %v1529
    %v1940 = vunpack.c.l.b16 %v1530
    %v1941 = vunpack.c.h.b16 %v1530
    %v1942 = vunpack.c.l.b16 %v1531
    %v1943 = vunpack.c.h.b16 %v1531
    %v1944 = vunpack.c.l.b16 %v1532
    %v1945 = vpack.c.b16 %v1940, %v1935
    %v1946 = vpack.c.b16 %v1941, %v1936
    %v1947 = vpack.c.b16 %v1942, %v1937
    %v1948 = vpack.c.b16 %v1943, %v1938
    %v1949 = vpack.c.b16 %v1944, %v1939
    %1950 = vrot.lane.b32.xlu0 %v1945, 126
    %v1951 = vpop.permute.xlu0 %1950
    %1952 = vrot.lane.b32.xlu0 %v1946, 126
    %v1953 = vpop.permute.xlu0 %1952
    %1954 = vrot.lane.b32.xlu0 %v1947, 126
    %v1955 = vpop.permute.xlu0 %1954
    %1956 = vrot.lane.b32.xlu0 %v1948, 126
    %v1957 = vpop.permute.xlu0 %1956
    %1958 = vrot.lane.b32.xlu0 %v1949, 126
    %v1959 = vpop.permute.xlu0 %1958
    %v1960 = vsel %vm697, %v1951, %v1953
    %v1961 = vsel %vm697, %v1953, %v1955
    %v1962 = vsel %vm697, %v1955, %v1957
    %v1963 = vsel %vm697, %v1957, %v1959
    %v1970 = vunpack.c.l.b16 %v1583
    %v1971 = vunpack.c.h.b16 %v1583
    %v1972 = vunpack.c.l.b16 %v1584
    %v1973 = vunpack.c.h.b16 %v1584
    %v1974 = vunpack.c.l.b16 %v1585
    %v1975 = vunpack.c.l.b16 %v1586
    %v1976 = vunpack.c.h.b16 %v1586
    %v1977 = vunpack.c.l.b16 %v1587
    %v1978 = vunpack.c.h.b16 %v1587
    %v1979 = vunpack.c.l.b16 %v1588
    %v1980 = vpack.c.b16 %v1975, %v1970
    %v1981 = vpack.c.b16 %v1976, %v1971
    %v1982 = vpack.c.b16 %v1977, %v1972
    %v1983 = vpack.c.b16 %v1978, %v1973
    %v1984 = vpack.c.b16 %v1979, %v1974
    %1985 = vrot.lane.b32.xlu0 %v1980, 112
    %v1986 = vpop.permute.xlu0 %1985
    %1987 = vrot.lane.b32.xlu0 %v1981, 112
    %v1988 = vpop.permute.xlu0 %1987
    %1989 = vrot.lane.b32.xlu0 %v1982, 112
    %v1990 = vpop.permute.xlu0 %1989
    %1991 = vrot.lane.b32.xlu0 %v1983, 112
    %v1992 = vpop.permute.xlu0 %1991
    %1993 = vrot.lane.b32.xlu0 %v1984, 112
    %v1994 = vpop.permute.xlu0 %1993
    %v1995 = vsel %vm733, %v1986, %v1988
    %v1996 = vsel %vm733, %v1988, %v1990
    %v1997 = vsel %vm733, %v1990, %v1992
    %v1998 = vsel %vm733, %v1992, %v1994
    %v2003 = vunpack.c.l.b16 %v1589
    %v2004 = vunpack.c.h.b16 %v1589
    %v2005 = vunpack.c.l.b16 %v1590
    %v2006 = vunpack.c.h.b16 %v1590
    %v2007 = vunpack.c.l.b16 %v1591
    %v2008 = vunpack.c.h.b16 %v1591
    %v2009 = vunpack.c.l.b16 %v1592
    %v2010 = vunpack.c.h.b16 %v1592
    %v2011 = vpack.c.b16 %v2007, %v2003
    %v2012 = vpack.c.b16 %v2008, %v2004
    %v2013 = vpack.c.b16 %v2009, %v2005
    %v2014 = vpack.c.b16 %v2010, %v2006
    %2015 = vrot.lane.b32.xlu0 %v2011, 111
    %v2016 = vpop.permute.xlu0 %2015
    %2017 = vrot.lane.b32.xlu0 %v2012, 111
    %v2018 = vpop.permute.xlu0 %2017
    %2019 = vrot.lane.b32.xlu0 %v2013, 111
    %v2020 = vpop.permute.xlu0 %2019
    %2021 = vrot.lane.b32.xlu0 %v2014, 111
    %v2022 = vpop.permute.xlu0 %2021
    %v2023 = vsel %vm762, %v2016, %v2018
    %v2024 = vsel %vm762, %v2018, %v2020
    %v2025 = vsel %vm762, %v2020, %v2022
    %v2032 = vunpack.c.l.b16 %v1675
    %v2033 = vunpack.c.h.b16 %v1675
    %v2034 = vunpack.c.l.b16 %v1676
    %v2035 = vunpack.c.h.b16 %v1676
    %v2036 = vunpack.c.l.b16 %v1677
    %v2037 = vunpack.c.l.b16 %v1678
    %v2038 = vunpack.c.h.b16 %v1678
    %v2039 = vunpack.c.l.b16 %v1679
    %v2040 = vunpack.c.h.b16 %v1679
    %v2041 = vunpack.c.l.b16 %v1680
    %v2042 = vpack.c.b16 %v2037, %v2032
    %v2043 = vpack.c.b16 %v2038, %v2033
    %v2044 = vpack.c.b16 %v2039, %v2034
    %v2045 = vpack.c.b16 %v2040, %v2035
    %v2046 = vpack.c.b16 %v2041, %v2036
    %2047 = vrot.lane.b32.xlu0 %v2042, 110
    %v2048 = vpop.permute.xlu0 %2047
    %2049 = vrot.lane.b32.xlu0 %v2043, 110
    %v2050 = vpop.permute.xlu0 %2049
    %2051 = vrot.lane.b32.xlu0 %v2044, 110
    %v2052 = vpop.permute.xlu0 %2051
    %2053 = vrot.lane.b32.xlu0 %v2045, 110
    %v2054 = vpop.permute.xlu0 %2053
    %2055 = vrot.lane.b32.xlu0 %v2046, 110
    %v2056 = vpop.permute.xlu0 %2055
    %v2057 = vsel %vm797, %v2048, %v2050
    %v2058 = vsel %vm797, %v2050, %v2052
    %v2059 = vsel %vm797, %v2052, %v2054
    %v2060 = vsel %vm797, %v2054, %v2056
    %v2067 = vunpack.c.l.b16 %v1743
    %v2068 = vunpack.c.h.b16 %v1743
    %v2069 = vunpack.c.l.b16 %v1744
    %v2070 = vunpack.c.h.b16 %v1744
    %v2071 = vunpack.c.l.b16 %v1745
    %v2072 = vunpack.c.l.b16 %v1746
    %v2073 = vunpack.c.h.b16 %v1746
    %v2074 = vunpack.c.l.b16 %v1747
    %v2075 = vunpack.c.h.b16 %v1747
    %v2076 = vunpack.c.l.b16 %v1748
    %v2077 = vpack.c.b16 %v2072, %v2067
    %v2078 = vpack.c.b16 %v2073, %v2068
    %v2079 = vpack.c.b16 %v2074, %v2069
    %v2080 = vpack.c.b16 %v2075, %v2070
    %v2081 = vpack.c.b16 %v2076, %v2071
    %2082 = vrot.lane.b32.xlu0 %v2077, 96
    %v2083 = vpop.permute.xlu0 %2082
    %2084 = vrot.lane.b32.xlu0 %v2078, 96
    %v2085 = vpop.permute.xlu0 %2084
    %2086 = vrot.lane.b32.xlu0 %v2079, 96
    %v2087 = vpop.permute.xlu0 %2086
    %2088 = vrot.lane.b32.xlu0 %v2080, 96
    %v2089 = vpop.permute.xlu0 %2088
    %2090 = vrot.lane.b32.xlu0 %v2081, 96
    %v2091 = vpop.permute.xlu0 %2090
    %v2092 = vsel %vm833, %v2083, %v2085
    %v2093 = vsel %vm833, %v2085, %v2087
    %v2094 = vsel %vm833, %v2087, %v2089
    %v2095 = vsel %vm833, %v2089, %v2091
    %v2102 = vunpack.c.l.b16 %v1799
    %v2103 = vunpack.c.h.b16 %v1799
    %v2104 = vunpack.c.l.b16 %v1800
    %v2105 = vunpack.c.h.b16 %v1800
    %v2106 = vunpack.c.l.b16 %v1801
    %v2107 = vunpack.c.l.b16 %v1802
    %v2108 = vunpack.c.h.b16 %v1802
    %v2109 = vunpack.c.l.b16 %v1803
    %v2110 = vunpack.c.h.b16 %v1803
    %v2111 = vunpack.c.l.b16 %v1804
    %v2112 = vpack.c.b16 %v2107, %v2102
    %v2113 = vpack.c.b16 %v2108, %v2103
    %v2114 = vpack.c.b16 %v2109, %v2104
    %v2115 = vpack.c.b16 %v2110, %v2105
    %v2116 = vpack.c.b16 %v2111, %v2106
    %2117 = vrot.lane.b32.xlu0 %v2112, 95
    %v2118 = vpop.permute.xlu0 %2117
    %2119 = vrot.lane.b32.xlu0 %v2113, 95
    %v2120 = vpop.permute.xlu0 %2119
    %2121 = vrot.lane.b32.xlu0 %v2114, 95
    %v2122 = vpop.permute.xlu0 %2121
    %2123 = vrot.lane.b32.xlu0 %v2115, 95
    %v2124 = vpop.permute.xlu0 %2123
    %2125 = vrot.lane.b32.xlu0 %v2116, 95
    %v2126 = vpop.permute.xlu0 %2125
    %v2127 = vsel %vm869, %v2118, %v2120
    %v2128 = vsel %vm869, %v2120, %v2122
    %v2129 = vsel %vm869, %v2122, %v2124
    %v2130 = vsel %vm869, %v2124, %v2126
    %v2137 = vunpack.c.l.b16 %v1867
    %v2138 = vunpack.c.h.b16 %v1867
    %v2139 = vunpack.c.l.b16 %v1868
    %v2140 = vunpack.c.h.b16 %v1868
    %v2141 = vunpack.c.l.b16 %v1869
    %v2142 = vunpack.c.l.b16 %v1870
    %v2143 = vunpack.c.h.b16 %v1870
    %v2144 = vunpack.c.l.b16 %v1871
    %v2145 = vunpack.c.h.b16 %v1871
    %v2146 = vunpack.c.l.b16 %v1872
    %v2147 = vpack.c.b16 %v2142, %v2137
    %v2148 = vpack.c.b16 %v2143, %v2138
    %v2149 = vpack.c.b16 %v2144, %v2139
    %v2150 = vpack.c.b16 %v2145, %v2140
    %v2151 = vpack.c.b16 %v2146, %v2141
    %2152 = vrot.lane.b32.xlu0 %v2147, 94
    %v2153 = vpop.permute.xlu0 %2152
    %2154 = vrot.lane.b32.xlu0 %v2148, 94
    %v2155 = vpop.permute.xlu0 %2154
    %2156 = vrot.lane.b32.xlu0 %v2149, 94
    %v2157 = vpop.permute.xlu0 %2156
    %2158 = vrot.lane.b32.xlu0 %v2150, 94
    %v2159 = vpop.permute.xlu0 %2158
    %2160 = vrot.lane.b32.xlu0 %v2151, 94
    %v2161 = vpop.permute.xlu0 %2160
    %v2162 = vsel %vm905, %v2153, %v2155
    %v2163 = vsel %vm905, %v2155, %v2157
    %v2164 = vsel %vm905, %v2157, %v2159
    %v2165 = vsel %vm905, %v2159, %v2161
    %v2168 = vunpack.c.l.b16 %v1323
    %v2169 = vunpack.c.h.b16 %v1323
    %v2170 = vunpack.c.l.b16 %v1324
    %v2171 = vunpack.c.h.b16 %v1324
    %v2172 = vpack.c.b16 %v2170, %v2168
    %v2173 = vpack.c.b16 %v2171, %v2169
    %2175 = vrot.lane.b32.xlu0 %v1889, 17
    %v2176 = vpop.permute.xlu0 %2175
    %2177 = vrot.lane.b32.xlu0 %v1890, 17
    %v2178 = vpop.permute.xlu0 %2177
    %2179 = vrot.lane.b32.xlu0 %v1891, 17
    %v2180 = vpop.permute.xlu0 %2179
    %2181 = vrot.lane.b32.xlu0 %v1892, 17
    %v2182 = vpop.permute.xlu0 %2181
    %2183 = vrot.lane.b32.xlu0 %v1893, 17
    %v2184 = vpop.permute.xlu0 %2183
    %2185 = vrot.lane.b32.xlu0 %v1925, 17
    %v2186 = vpop.permute.xlu0 %2185
    %2187 = vrot.lane.b32.xlu0 %v1926, 17
    %v2188 = vpop.permute.xlu0 %2187
    %2189 = vrot.lane.b32.xlu0 %v1927, 17
    %v2190 = vpop.permute.xlu0 %2189
    %2191 = vrot.lane.b32.xlu0 %v1928, 17
    %v2192 = vpop.permute.xlu0 %2191
    %2193 = vrot.lane.b32.xlu0 %v1924, 17
    %v2194 = vpop.permute.xlu0 %2193
    %2195 = vrot.lane.b32.xlu0 %v1960, 17
    %v2196 = vpop.permute.xlu0 %2195
    %2197 = vrot.lane.b32.xlu0 %v1961, 17
    %v2198 = vpop.permute.xlu0 %2197
    %2199 = vrot.lane.b32.xlu0 %v1962, 17
    %v2200 = vpop.permute.xlu0 %2199
    %2201 = vrot.lane.b32.xlu0 %v1963, 17
    %v2202 = vpop.permute.xlu0 %2201
    %2203 = vrot.lane.b32.xlu0 %v1959, 17
    %v2204 = vpop.permute.xlu0 %2203
    %2205 = vrot.lane.b32.xlu0 %v1995, 17
    %v2206 = vpop.permute.xlu0 %2205
    %2207 = vrot.lane.b32.xlu0 %v1996, 17
    %v2208 = vpop.permute.xlu0 %2207
    %2209 = vrot.lane.b32.xlu0 %v1997, 17
    %v2210 = vpop.permute.xlu0 %2209
    %2211 = vrot.lane.b32.xlu0 %v1998, 17
    %v2212 = vpop.permute.xlu0 %2211
    %2213 = vrot.lane.b32.xlu0 %v1994, 17
    %v2214 = vpop.permute.xlu0 %2213
    %2215 = vrot.lane.b32.xlu0 %v2016, 17
    %v2216 = vpop.permute.xlu0 %2215
    %2217 = vrot.lane.b32.xlu0 %v2023, 17
    %v2218 = vpop.permute.xlu0 %2217
    %2219 = vrot.lane.b32.xlu0 %v2024, 17
    %v2220 = vpop.permute.xlu0 %2219
    %2221 = vrot.lane.b32.xlu0 %v2025, 17
    %v2222 = vpop.permute.xlu0 %2221
    %2223 = vrot.lane.b32.xlu0 %v2022, 17
    %v2224 = vpop.permute.xlu0 %2223
    %2225 = vrot.lane.b32.xlu0 %v2048, 17
    %v2226 = vpop.permute.xlu0 %2225
    %2227 = vrot.lane.b32.xlu0 %v2057, 17
    %v2228 = vpop.permute.xlu0 %2227
    %2229 = vrot.lane.b32.xlu0 %v2058, 17
    %v2230 = vpop.permute.xlu0 %2229
    %2231 = vrot.lane.b32.xlu0 %v2059, 17
    %v2232 = vpop.permute.xlu0 %2231
    %2233 = vrot.lane.b32.xlu0 %v2060, 17
    %v2234 = vpop.permute.xlu0 %2233
    %2235 = vrot.lane.b32.xlu0 %v2083, 17
    %v2236 = vpop.permute.xlu0 %2235
    %2237 = vrot.lane.b32.xlu0 %v2092, 17
    %v2238 = vpop.permute.xlu0 %2237
    %2239 = vrot.lane.b32.xlu0 %v2093, 17
    %v2240 = vpop.permute.xlu0 %2239
    %2241 = vrot.lane.b32.xlu0 %v2094, 17
    %v2242 = vpop.permute.xlu0 %2241
    %2243 = vrot.lane.b32.xlu0 %v2095, 17
    %v2244 = vpop.permute.xlu0 %2243
    %2245 = vrot.lane.b32.xlu0 %v2118, 17
    %v2246 = vpop.permute.xlu0 %2245
    %2247 = vrot.lane.b32.xlu0 %v2127, 17
    %v2248 = vpop.permute.xlu0 %2247
    %2249 = vrot.lane.b32.xlu0 %v2128, 17
    %v2250 = vpop.permute.xlu0 %2249
    %2251 = vrot.lane.b32.xlu0 %v2129, 17
    %v2252 = vpop.permute.xlu0 %2251
    %2253 = vrot.lane.b32.xlu0 %v2130, 17
    %v2254 = vpop.permute.xlu0 %2253
    %2255 = vrot.lane.b32.xlu0 %v2153, 17
    %v2256 = vpop.permute.xlu0 %2255
    %2257 = vrot.lane.b32.xlu0 %v2162, 17
    %v2258 = vpop.permute.xlu0 %2257
    %2259 = vrot.lane.b32.xlu0 %v2163, 17
    %v2260 = vpop.permute.xlu0 %2259
    %2261 = vrot.lane.b32.xlu0 %v2164, 17
    %v2262 = vpop.permute.xlu0 %2261
    %2263 = vrot.lane.b32.xlu0 %v2165, 17
    %v2264 = vpop.permute.xlu0 %2263
    %v2265 = vsel %vm1009, %v2176, %v2178
    %v2266 = vsel %vm1009, %v2178, %v2180
    %v2267 = vsel %vm1009, %v2180, %v2182
    %v2268 = vsel %vm1009, %v2182, %v2184
    %v2269 = vsel %vm1009, %v2186, %v2188
    %v2270 = vsel %vm1009, %v2188, %v2190
    %v2271 = vsel %vm1009, %v2190, %v2192
    %v2272 = vsel %vm1009, %v2192, %v2194
    %v2273 = vsel %vm1009, %v2196, %v2198
    %v2274 = vsel %vm1009, %v2198, %v2200
    %v2275 = vsel %vm1009, %v2200, %v2202
    %v2276 = vsel %vm1009, %v2202, %v2204
    %v2277 = vsel %vm1009, %v2206, %v2208
    %v2278 = vsel %vm1009, %v2208, %v2210
    %v2279 = vsel %vm1009, %v2210, %v2212
    %v2280 = vsel %vm1009, %v2212, %v2214
    %v2281 = vsel %vm1009, %v2216, %v2218
    %v2282 = vsel %vm1009, %v2218, %v2220
    %v2283 = vsel %vm1009, %v2220, %v2222
    %v2284 = vsel %vm1009, %v2222, %v2224
    %v2285 = vsel %vm1009, %v2226, %v2228
    %v2286 = vsel %vm1009, %v2228, %v2230
    %v2287 = vsel %vm1009, %v2230, %v2232
    %v2288 = vsel %vm1009, %v2232, %v2234
    %v2289 = vsel %vm1009, %v2236, %v2238
    %v2290 = vsel %vm1009, %v2238, %v2240
    %v2291 = vsel %vm1009, %v2240, %v2242
    %v2292 = vsel %vm1009, %v2242, %v2244
    %v2293 = vsel %vm1009, %v2246, %v2248
    %v2294 = vsel %vm1009, %v2248, %v2250
    %v2295 = vsel %vm1009, %v2250, %v2252
    %v2296 = vsel %vm1009, %v2252, %v2254
    %v2297 = vsel %vm1009, %v2256, %v2258
    %v2298 = vsel %vm1009, %v2258, %v2260
    %v2299 = vsel %vm1009, %v2260, %v2262
    %v2300 = vsel %vm1009, %v2262, %v2264
    %v2338 = vsel %vm515, %v2173, 0
    %2340 = vmatpush.bf16.msra.mxu0 %v2293
    %2341 = vmatpush.bf16.msra.mxu0 %v2289
    %2342 = vmatpush.bf16.msra.mxu0 %v2285
    %2343 = vmatpush.bf16.msra.mxu0 %v2281
    %2344 = vmatpush.bf16.msra.mxu0 %v2277
    %2345 = vmatpush.bf16.msra.mxu0 %v2273
    %2346 = vmatpush.bf16.msra.mxu0 %v2269
    %2347 = vmatpush.bf16.msra.mxu0 %v2265
    %2348 = vmatmul.bf16.gmra.mxu0 %v2172
    %v2349 = vpop.f32.mrf.mxu0
    %v2350 = vadd.f32 0.0, %v2349
    %v2351 = vpop.f32.mrf.mxu0
    %v2352 = vadd.f32 0.0, %v2351
    %2353 = vdwg.mxu0
    %2354 = vmatpush.bf16.msra.mxu0 0
    %2355 = vmatpush.bf16.msra.mxu0 0
    %2356 = vmatpush.bf16.msra.mxu0 0
    %2357 = vmatpush.bf16.msra.mxu0 0
    %2358 = vmatpush.bf16.msra.mxu0 0
    %2359 = vmatpush.bf16.msra.mxu0 0
    %2360 = vmatpush.bf16.msra.mxu0 0
    %2361 = vmatpush.bf16.msra.mxu0 %v2297
    %2362 = vmatmul.bf16.gmra.mxu0 %v2338
    %v2363 = vpop.f32.mrf.mxu0
    %v2364 = vadd.f32 %v2350, %v2363
    %v2365 = vpop.f32.mrf.mxu0
    %v2366 = vadd.f32 %v2352, %v2365
    %2367 = vdwg.mxu0
    %2368 = vmatpush.bf16.msra.mxu0 %v2294
    %2369 = vmatpush.bf16.msra.mxu0 %v2290
    %2370 = vmatpush.bf16.msra.mxu0 %v2286
    %2371 = vmatpush.bf16.msra.mxu0 %v2282
    %2372 = vmatpush.bf16.msra.mxu0 %v2278
    %2373 = vmatpush.bf16.msra.mxu0 %v2274
    %2374 = vmatpush.bf16.msra.mxu0 %v2270
    %2375 = vmatpush.bf16.msra.mxu0 %v2266
    %2376 = vmatmul.bf16.gmra.mxu0 %v2172
    %v2377 = vpop.f32.mrf.mxu0
    %v2378 = vadd.f32 0.0, %v2377
    %v2379 = vpop.f32.mrf.mxu0
    %v2380 = vadd.f32 0.0, %v2379
    %2381 = vdwg.mxu0
    %2382 = vmatpush.bf16.msra.mxu0 0
    %2383 = vmatpush.bf16.msra.mxu0 0
    %2384 = vmatpush.bf16.msra.mxu0 0
    %2385 = vmatpush.bf16.msra.mxu0 0
    %2386 = vmatpush.bf16.msra.mxu0 0
    %2387 = vmatpush.bf16.msra.mxu0 0
    %2388 = vmatpush.bf16.msra.mxu0 0
    %2389 = vmatpush.bf16.msra.mxu0 %v2298
    %2390 = vmatmul.bf16.gmra.mxu0 %v2338
    %v2391 = vpop.f32.mrf.mxu0
    %v2392 = vadd.f32 %v2378, %v2391
    %v2393 = vpop.f32.mrf.mxu0
    %v2394 = vadd.f32 %v2380, %v2393
    %2395 = vdwg.mxu0
    %2396 = vmatpush.bf16.msra.mxu0 %v2295
    %2397 = vmatpush.bf16.msra.mxu0 %v2291
    %2398 = vmatpush.bf16.msra.mxu0 %v2287
    %2399 = vmatpush.bf16.msra.mxu0 %v2283
    %2400 = vmatpush.bf16.msra.mxu0 %v2279
    %2401 = vmatpush.bf16.msra.mxu0 %v2275
    %2402 = vmatpush.bf16.msra.mxu0 %v2271
    %2403 = vmatpush.bf16.msra.mxu0 %v2267
    %2404 = vmatmul.bf16.gmra.mxu0 %v2172
    %v2405 = vpop.f32.mrf.mxu0
    %v2406 = vadd.f32 0.0, %v2405
    %v2407 = vpop.f32.mrf.mxu0
    %v2408 = vadd.f32 0.0, %v2407
    %2409 = vdwg.mxu0
    %2410 = vmatpush.bf16.msra.mxu0 0
    %2411 = vmatpush.bf16.msra.mxu0 0
    %2412 = vmatpush.bf16.msra.mxu0 0
    %2413 = vmatpush.bf16.msra.mxu0 0
    %2414 = vmatpush.bf16.msra.mxu0 0
    %2415 = vmatpush.bf16.msra.mxu0 0
    %2416 = vmatpush.bf16.msra.mxu0 0
    %2417 = vmatpush.bf16.msra.mxu0 %v2299
    %2418 = vmatmul.bf16.gmra.mxu0 %v2338
    %v2419 = vpop.f32.mrf.mxu0
    %v2420 = vadd.f32 %v2406, %v2419
    %v2421 = vpop.f32.mrf.mxu0
    %v2422 = vadd.f32 %v2408, %v2421
    %2423 = vdwg.mxu0
    %2424 = vmatpush.bf16.msra.mxu0 %v2296
    %2425 = vmatpush.bf16.msra.mxu0 %v2292
    %2426 = vmatpush.bf16.msra.mxu0 %v2288
    %2427 = vmatpush.bf16.msra.mxu0 %v2284
    %2428 = vmatpush.bf16.msra.mxu0 %v2280
    %2429 = vmatpush.bf16.msra.mxu0 %v2276
    %2430 = vmatpush.bf16.msra.mxu0 %v2272
    %2431 = vmatpush.bf16.msra.mxu0 %v2268
    %2432 = vmatmul.bf16.gmra.mxu0 %v2172
    %v2433 = vpop.f32.mrf.mxu0
    %v2434 = vadd.f32 0.0, %v2433
    %v2435 = vpop.f32.mrf.mxu0
    %v2436 = vadd.f32 0.0, %v2435
    %2437 = vdwg.mxu0
    %2438 = vmatpush.bf16.msra.mxu0 0
    %2439 = vmatpush.bf16.msra.mxu0 0
    %2440 = vmatpush.bf16.msra.mxu0 0
    %2441 = vmatpush.bf16.msra.mxu0 0
    %2442 = vmatpush.bf16.msra.mxu0 0
    %2443 = vmatpush.bf16.msra.mxu0 0
    %2444 = vmatpush.bf16.msra.mxu0 0
    %2445 = vmatpush.bf16.msra.mxu0 %v2300
    %2446 = vmatmul.bf16.gmra.mxu0 %v2338
    %v2447 = vpop.f32.mrf.mxu0
    %v2448 = vadd.f32 %v2434, %v2447
    %v2449 = vpop.f32.mrf.mxu0
    %v2450 = vadd.f32 %v2436, %v2449
    %2451 = vdwg.mxu0
    %v2452 = vadd.f32 %v2364, %v2392
    %v2453 = vadd.f32 %v2452, %v2420
    %v2454 = vadd.f32 %v2453, %v2448
    %2455 = vadd.xlane.f32.xlu0 %v2454
    %v2456 = vpop.xlane.xlu0 %2455
    %v2457 = vadd.f32 %v2366, %v2394
    %v2458 = vadd.f32 %v2457, %v2422
    %v2459 = vadd.f32 %v2458, %v2450
    %2460 = vadd.xlane.f32.xlu0 %v2459
    %v2461 = vpop.xlane.xlu0 %2460
    %v2462 = vadd.f32 %v2456, 0.0
    %v2463 = vadd.f32 %v2461, 0.0
    %v2464 = vmul.f32 %v2364, %v2364
    %v2465 = vmul.f32 %v2392, %v2392
    %v2466 = vmul.f32 %v2420, %v2420
    %v2467 = vmul.f32 %v2448, %v2448
    %v2468 = vmul.f32 %v2366, %v2366
    %v2469 = vmul.f32 %v2394, %v2394
    %v2470 = vmul.f32 %v2422, %v2422
    %v2471 = vmul.f32 %v2450, %v2450
    %v2472 = vadd.f32 %v2464, %v2465
    %v2473 = vadd.f32 %v2472, %v2466
    %v2474 = vadd.f32 %v2473, %v2467
    %2475 = vadd.xlane.f32.xlu0 %v2474
    %v2476 = vpop.xlane.xlu0 %2475
    %v2477 = vadd.f32 %v2468, %v2469
    %v2478 = vadd.f32 %v2477, %v2470
    %v2479 = vadd.f32 %v2478, %v2471
    %2480 = vadd.xlane.f32.xlu0 %v2479
    %v2481 = vpop.xlane.xlu0 %2480
    %v2482 = vadd.f32 %v2476, 0.0
    %v2483 = vadd.f32 %v2481, 0.0
    %v2484 = vmul.f32 %v2462, 0.001953125
    %v2485 = vmul.f32 %v2463, 0.001953125
    %v2486 = vmul.f32 %v2482, 0.001953125
    %v2487 = vmul.f32 %v2483, 0.001953125
    %v2488 = vmul.f32 %v2484, %v2484
    %v2489 = vmul.f32 %v2485, %v2485
    %v2490 = vsub.f32 %v2486, %v2488
    %v2491 = vsub.f32 %v2487, %v2489
    %v2492 = vmax.f32 %v2490, 0.0
    %v2493 = vmax.f32 %v2491, 0.0
    %v2494 = vld [vmem:[%s6] sm:$0xff]
    %v2495 = vld [vmem:[%s6 + $0x8] sm:$0xff]
    %v2496 = vadd.f32 %v2492, 1e-05
    %v2497 = vadd.f32 %v2493, 1e-05
    %v2498 = vrsqrt.pop %v2496
    %v2499 = vmul.f32 %v2498, %v2496
    %v2500 = vmul.f32 %v2499, %v2498
    %v2501 = vmul.f32 0.5, %v2500
    %v2502 = vsub.f32 1.5, %v2501
    %v2503 = vmul.f32 %v2498, %v2502
    %vm2504 = vweird.f32 %v2496
    %vm2505 = vweird.f32 %v2498
    %vm2506 = vmor %vm2504, %vm2505
    %v2507 = vsel %vm2506, %v2498, %v2503
    %v2508 = vrsqrt.pop %v2497
    %v2509 = vmul.f32 %v2508, %v2497
    %v2510 = vmul.f32 %v2509, %v2508
    %v2511 = vmul.f32 0.5, %v2510
    %v2512 = vsub.f32 1.5, %v2511
    %v2513 = vmul.f32 %v2508, %v2512
    %vm2514 = vweird.f32 %v2497
    %vm2515 = vweird.f32 %v2508
    %vm2516 = vmor %vm2514, %vm2515
    %v2517 = vsel %vm2516, %v2508, %v2513
    %v2518 = vmul.f32 %v2494, %v2507
    %v2519 = vmul.f32 %v2495, %v2517
    %v2520 = vld [vmem:[%s7] sm:$0xff]
    %v2521 = vld [vmem:[%s7 + $0x8] sm:$0xff]
    %v2522 = vmul.f32 %v2484, %v2518
    %v2523 = vmul.f32 %v2485, %v2519
    %v2524 = vsub.f32 %v2520, %v2522
    %v2525 = vsub.f32 %v2521, %v2523
    %2527 = vset.pattern.permute.xlu0 0
    %2528 = vperm.xlu0 %2527, %v2518
    %v2529 = vpop.permute.xlu0 %2528
    %2532 = vset.pattern.permute.xlu0 0
    %2533 = vperm.xlu0 %2532, %v2519
    %v2534 = vpop.permute.xlu0 %2533
    %v2536 = vmul.f32 %v2364, %v2529
    %v2537 = vmul.f32 %v2392, %v2529
    %v2538 = vmul.f32 %v2420, %v2529
    %v2539 = vmul.f32 %v2448, %v2529
    %v2540 = vmul.f32 %v2366, %v2534
    %v2541 = vmul.f32 %v2394, %v2534
    %v2542 = vmul.f32 %v2422, %v2534
    %v2543 = vmul.f32 %v2450, %v2534
    %2545 = vset.pattern.permute.xlu0 0
    %2546 = vperm.xlu0 %2545, %v2524
    %v2547 = vpop.permute.xlu0 %2546
    %2550 = vset.pattern.permute.xlu0 0
    %2551 = vperm.xlu0 %2550, %v2525
    %v2552 = vpop.permute.xlu0 %2551
    %v2554 = vadd.f32 %v2536, %v2547
    %v2555 = vadd.f32 %v2537, %v2547
    %v2556 = vadd.f32 %v2538, %v2547
    %v2557 = vadd.f32 %v2539, %v2547
    %v2558 = vadd.f32 %v2540, %v2552
    %v2559 = vadd.f32 %v2541, %v2552
    %v2560 = vadd.f32 %v2542, %v2552
    %v2561 = vadd.f32 %v2543, %v2552
    %v2562 = vmax.f32 %v2554, 0.0
    %v2563 = vmax.f32 %v2555, 0.0
    %v2564 = vmax.f32 %v2556, 0.0
    %v2565 = vmax.f32 %v2557, 0.0
    %v2566 = vmax.f32 %v2558, 0.0
    %v2567 = vmax.f32 %v2559, 0.0
    %v2568 = vmax.f32 %v2560, 0.0
    %v2569 = vmax.f32 %v2561, 0.0
    %2570 = vst [vmem:[#allocation7] sm:$0xff] %v2562
    %2571 = vst [vmem:[#allocation7 + $0x8] sm:$0xff] %v2563
    %2572 = vst [vmem:[#allocation7 + $0x10] sm:$0xff] %v2564
    %2573 = vst [vmem:[#allocation7 + $0x18] sm:$0xff] %v2565
    %2574 = vst [vmem:[#allocation7 + $0x20] sm:$0xff] %v2566
    %2575 = vst [vmem:[#allocation7 + $0x28] sm:$0xff] %v2567
    %2576 = vst [vmem:[#allocation7 + $0x30] sm:$0xff] %v2568
    %2577 = vst [vmem:[#allocation7 + $0x38] sm:$0xff] %v2569
    // Predicated region
    $region38: #{tpu_custom_call.1} parent=1 // pred_check
      _
    $region39: #{tpu_custom_call.1} parent=1 // pred_check_branch
      %2579 = sbr.rel (0) target = $region41
    $region40: #{tpu_custom_call.1} parent=1 // pred_region
      %2581 = vsyncadd [#allocation6], 0
      %s2582 = sshll.u32 [#allocation7], 4
      %s2583 = int_to_ptr.vmem [resolvable:$true] %s2582
      %s2584 = sshll.u32 %s8, 4
      %s2585 = int_to_ptr.hbm [resolvable:$true] %s2584
      %2590 = dma.vmem_to_hbm [thread:$0]  %s2583, 1024, %s2585, [#allocation6], 512, 512, 32
    $region41: #{tpu_custom_call.1} parent=1 // pred_fallthru
      _
    // Predicated region
    $region42: #{tpu_custom_call.1} parent=1 // pred_check
      _
    $region43: #{tpu_custom_call.1} parent=1 // pred_check_branch
      %2592 = sbr.rel (0) target = $region45
    $region44: #{tpu_custom_call.1} parent=1 // pred_region
      %2594 = dma.done [#allocation6], 1024
    $region45: #{tpu_custom_call.1} parent=1 // pred_fallthru
      _
    %2595 = vsyncpa [#allocation5], 1
    %2596 = vsyncpa [#allocation6], 1

</llo_original>
